<compile_context>
chip_gen: v6e
topology: v6e:2x2x1
jax: 0.10.0
libtpu: 0.0.40
codegen_flags: <defaults>
</compile_context>

<pallas_src>
import functools

import jax
import jax.numpy as jnp
import numpy as np
from jax.experimental import pallas as pl
from jax.experimental.pallas import tpu as pltpu


# ----------------------------------------------------------------------------
# helpers
# ----------------------------------------------------------------------------
def _round_up(x, m):
    return (x + m - 1) // m * m


def _choose_vocab_tile(vp, max_tile=2048):
    """Largest multiple of 128 that divides vp and is <= max_tile."""
    tile = 128
    cand = 128
    while cand <= min(vp, max_tile):
        if vp % cand == 0:
            tile = cand
        cand += 128
    return tile


def _vmem_estimate(bp, seq_len, hp, tv):
    bf, f4 = 2, 4
    resident = (
        bp * hp * bf                 # embedded x (bf16)
        + bp * hp * f4               # h0 (f32)
        + bp * seq_len * hp * bf     # encoder outputs (bf16)
        + 2 * hp * 3 * hp * bf       # w_ih, w_hh
        + 2 * 3 * hp * f4            # b_ih, b_hh
        + 2 * hp * hp * bf           # w_concat
        + hp * f4                    # b_concat
        + bp * hp * f4               # hidden output
        + 2 * bp * f4                # running max / sum outputs
        + bp * hp * bf               # concat_out scratch
    )
    tiled = 2 * (hp * tv * bf + tv * f4 + bp * tv * f4)   # double-buffered V tiles
    return int(min(max(2 * (resident + tiled), 32 * 2**20), 60 * 2**20))


# ----------------------------------------------------------------------------
# Pallas kernels
# ----------------------------------------------------------------------------
def luong_decoder_kernel(Hp,
                         x_ref, h_ref, enc_ref, wih_ref, whh_ref, bih_ref, bhh_ref,
                         wc_ref, bc_ref, wout_ref, bout_ref,
                         logits_ref, hid_ref, m_ref, l_ref, co_ref):
    """Grid: (num_vocab_tiles,) marked 'arbitrary'.

    j == 0 : fused GRU step + Luong dot attention + concat projection.
             Result kept resident in VMEM (co_ref scratch, hid/m/l outputs).
    every j: one (Hp, tV) slab of the output projection + online softmax stats.
    """
    f32, bf16 = jnp.float32, jnp.bfloat16
    j = pl.program_id(0)

    @pl.when(j == 0)
    def _compute_decoder_state():
        x = x_ref[...]                                   # (Bp, Hp)  bf16
        h = h_ref[...]                                   # (Bp, Hp)  f32
        enc = enc_ref[...]                               # (Bp, L, Hp) bf16
        bp = h.shape[0]

        # ---- GRU cell: two fused gate matmuls (gate order [r, z, n]) ----
        gx = jnp.dot(x, wih_ref[...], preferred_element_type=f32) + bih_ref[...]
        gh = jnp.dot(h.astype(bf16), whh_ref[...],
                     preferred_element_type=f32) + bhh_ref[...]
        r = jax.nn.sigmoid(gx[:, :Hp] + gh[:, :Hp])
        z = jax.nn.sigmoid(gx[:, Hp:2 * Hp] + gh[:, Hp:2 * Hp])
        n = jnp.tanh(gx[:, 2 * Hp:] + r * gh[:, 2 * Hp:])
        h_new = (1.0 - z) * n + z * h                    # (Bp, Hp) f32

        # ---- Luong dot attention: contractions on the MXU (batched dots) ----
        hq = h_new.astype(bf16).reshape(bp, 1, Hp)                       # (Bp,1,Hp)
        energies = jnp.einsum('bqh,blh->bql', hq, enc,
                              preferred_element_type=f32)                # (Bp,1,L)
        e_max = jnp.max(energies, axis=-1, keepdims=True)
        e_exp = jnp.exp(energies - e_max)
        attn = e_exp * pl.reciprocal(
            jnp.sum(e_exp, axis=-1, keepdims=True), approx=True)         # (Bp,1,L)
        context = jnp.einsum('bql,blh->bqh', attn.astype(bf16), enc,
                             preferred_element_type=f32).reshape(bp, Hp)  # (Bp,Hp)

        # ---- fused concat Linear (2Hp -> Hp) + tanh ----
        cat = jnp.concatenate([h_new, context], axis=-1).astype(bf16)     # (Bp,2Hp)
        concat_out = jnp.tanh(
            jnp.dot(cat, wc_ref[...], preferred_element_type=f32) + bc_ref[...])

        hid_ref[...] = h_new
        co_ref[...] = concat_out.astype(bf16)
        m_ref[...] = jnp.full(m_ref.shape, -1e30, f32)
        l_ref[...] = jnp.zeros(l_ref.shape, f32)

    # ---- vocab tile j: logits + running (online) softmax max / sum-exp ----
    logits = jnp.dot(co_ref[...], wout_ref[...],
                     preferred_element_type=f32) + bout_ref[...]          # (Bp,tV)
    logits_ref[...] = logits

    m_prev = m_ref[...]
    m_new = jnp.maximum(m_prev, jnp.max(logits, axis=-1, keepdims=True))
    l_ref[...] = (l_ref[...] * jnp.exp(m_prev - m_new)
                  + jnp.sum(jnp.exp(logits - m_new), axis=-1, keepdims=True))
    m_ref[...] = m_new


def softmax_finalize_kernel(logits_ref, m_ref, l_ref, probs_ref):
    """Normalize one lane-dense vocab tile: exp(logits - m) / l."""
    inv_l = pl.reciprocal(l_ref[...], approx=True)          # (Bp, 1)
    probs_ref[...] = jnp.exp(logits_ref[...] - m_ref[...]) * inv_l


# ----------------------------------------------------------------------------
# Parameters: logical (PyTorch-like, f32) and packed (fused / padded / bf16)
# ----------------------------------------------------------------------------
def init_params(key, num_words, hidden_size, output_size):
    ks = jax.random.split(key, 9)
    s = 0.1
    H = hidden_size
    return {
        "embedding": jax.random.normal(ks[0], (num_words, H), jnp.float32) * s,
        "w_ih": jax.random.normal(ks[1], (3, H, H), jnp.float32) * s,   # gates [r,z,n]
        "w_hh": jax.random.normal(ks[2], (3, H, H), jnp.float32) * s,
        "b_ih": jax.random.normal(ks[3], (3, H), jnp.float32) * s,
        "b_hh": jax.random.normal(ks[4], (3, H), jnp.float32) * s,
        "w_concat": jax.random.normal(ks[5], (2 * H, H), jnp.float32) * s,
        "b_concat": jax.random.normal(ks[6], (H,), jnp.float32) * s,
        "w_out": jax.random.normal(ks[7], (H, output_size), jnp.float32) * s,
        "b_out": jax.random.normal(ks[8], (output_size,), jnp.float32) * s,
    }


def pack_params(params):
    """One-time fuse / pad / bf16-cast of the parameters into kernel layout."""
    H, V = params["w_out"].shape
    Hp = _round_up(H, 128)
    Vp = _round_up(V, 128)
    bf16 = jnp.bfloat16

    def pad_hh(w):                                         # (H,H) -> (Hp,Hp)
        return jnp.pad(w, ((0, Hp - H), (0, Hp - H)))

    w_ih = jnp.concatenate([pad_hh(params["w_ih"][k]) for k in range(3)], axis=1)
    w_hh = jnp.concatenate([pad_hh(params["w_hh"][k]) for k in range(3)], axis=1)
    b_ih = jnp.concatenate([jnp.pad(params["b_ih"][k], (0, Hp - H)) for k in range(3)])[None]
    b_hh = jnp.concatenate([jnp.pad(params["b_hh"][k], (0, Hp - H)) for k in range(3)])[None]

    wc = params["w_concat"]                                # (2H, H)
    w_cat = jnp.zeros((2 * Hp, Hp), jnp.float32)
    w_cat = w_cat.at[:H, :H].set(wc[:H]).at[Hp:Hp + H, :H].set(wc[H:])
    b_cat = jnp.pad(params["b_concat"], (0, Hp - H))[None]

    w_out = jnp.pad(params["w_out"], ((0, Hp - H), (0, Vp - V)))
    b_out = jnp.concatenate(
        [params["b_out"], jnp.full((Vp - V,), -1e30, jnp.float32)])[None]

    emb = jnp.pad(params["embedding"], ((0, 0), (0, Hp - H))).astype(bf16)

    return {
        "H": H, "V": V, "Hp": Hp, "Vp": Vp,
        "embedding": emb,
        "w_ih": w_ih.astype(bf16), "w_hh": w_hh.astype(bf16),
        "b_ih": b_ih, "b_hh": b_hh,
        "w_concat": w_cat.astype(bf16), "b_concat": b_cat,
        "w_out": w_out.astype(bf16), "b_out": b_out,
    }


# ----------------------------------------------------------------------------
# Forward wrapper
# ----------------------------------------------------------------------------
def luong_attn_decoder_forward(packed, input_seq, last_hidden, encoder_outputs,
                               *, max_vocab_tile=2048):
    """input_seq: (1,B) int32; last_hidden: (1,B,H) f32; encoder_outputs: (L,B,H) f32."""
    H, V, Hp, Vp = packed["H"], packed["V"], packed["Hp"], packed["Vp"]
    B = input_seq.shape[1]
    L = encoder_outputs.shape[0]
    Bp = _round_up(B, 8)
    tV = _choose_vocab_tile(Vp, max_vocab_tile)
    nV = Vp // tV
    f32, bf16 = jnp.float32, jnp.bfloat16

    # glue: embedding gather (identity dropout, eval mode) + padding + batch-major
    # encoder layout (transpose fused with the f32 -> bf16 downcast).
    ids = jnp.pad(input_seq[0], (0, Bp - B))
    x = packed["embedding"][ids]                                        # (Bp,Hp) bf16
    h0 = jnp.pad(last_hidden[0], ((0, Bp - B), (0, Hp - H)))            # (Bp,Hp) f32
    enc = jnp.pad(jnp.transpose(encoder_outputs, (1, 0, 2)).astype(bf16),
                  ((0, Bp - B), (0, 0), (0, Hp - H)))                   # (Bp,L,Hp) bf16

    const2 = lambda j: (0, 0)
    const3 = lambda j: (0, 0, 0)
    in_specs = [
        pl.BlockSpec((Bp, Hp), const2),            # x
        pl.BlockSpec((Bp, Hp), const2),            # h0
        pl.BlockSpec((Bp, L, Hp), const3),         # encoder outputs
        pl.BlockSpec((Hp, 3 * Hp), const2),        # w_ih (fused gates)
        pl.BlockSpec((Hp, 3 * Hp), const2),        # w_hh (fused gates)
        pl.BlockSpec((1, 3 * Hp), const2),         # b_ih
        pl.BlockSpec((1, 3 * Hp), const2),         # b_hh
        pl.BlockSpec((2 * Hp, Hp), const2),        # w_concat (fused)
        pl.BlockSpec((1, Hp), const2),             # b_concat
        pl.BlockSpec((Hp, tV), lambda j: (0, j)),  # w_out   (vocab-tiled)
        pl.BlockSpec((1, tV), lambda j: (0, j)),   # b_out   (vocab-tiled)
    ]
    out_shape = (
        jax.ShapeDtypeStruct((Bp, Vp), f32),       # logits
        jax.ShapeDtypeStruct((Bp, Hp), f32),       # new hidden
        jax.ShapeDtypeStruct((Bp, 1), f32),        # running max
        jax.ShapeDtypeStruct((Bp, 1), f32),        # running sum(exp)
    )
    out_specs = (
        pl.BlockSpec((Bp, tV), lambda j: (0, j)),
        pl.BlockSpec((Bp, Hp), const2),
        pl.BlockSpec((Bp, 1), const2),
        pl.BlockSpec((Bp, 1), const2),
    )

    logits, hid, m, l = pl.pallas_call(
        functools.partial(luong_decoder_kernel, Hp),
        grid=(nV,),
        in_specs=in_specs,
        out_specs=out_specs,
        out_shape=out_shape,
        scratch_shapes=[pltpu.VMEM((Bp, Hp), bf16)],     # concat_out (resident)
        compiler_params=pltpu.CompilerParams(
            dimension_semantics=("arbitrary",),          # running softmax stats
            vmem_limit_bytes=_vmem_estimate(Bp, L, Hp, tV)),
    )(x, h0, enc,
      packed["w_ih"], packed["w_hh"], packed["b_ih"], packed["b_hh"],
      packed["w_concat"], packed["b_concat"], packed["w_out"], packed["b_out"])

    probs = pl.pallas_call(
        softmax_finalize_kernel,
        grid=(nV,),
        in_specs=[pl.BlockSpec((Bp, tV), lambda j: (0, j)),
                  pl.BlockSpec((Bp, 1), const2),
                  pl.BlockSpec((Bp, 1), const2)],
        out_specs=pl.BlockSpec((Bp, tV), lambda j: (0, j)),
        out_shape=jax.ShapeDtypeStruct((Bp, Vp), f32),
        compiler_params=pltpu.CompilerParams(
            dimension_semantics=("parallel",)),
    )(logits, m, l)

    return probs[:B, :V], hid[:B, :H][None]              # (B,V), (1,B,H)


# ----------------------------------------------------------------------------
# Pure-JAX reference (mirrors the PyTorch forward and the kernel's bf16 points)
# ----------------------------------------------------------------------------
def reference_forward(params, input_seq, last_hidden, encoder_outputs):
    f32 = jnp.float32
    q = lambda a: a.astype(jnp.bfloat16).astype(f32)
    H = params["w_out"].shape[0]

    x = q(params["embedding"])[input_seq[0]]                     # (B,H)
    h = last_hidden[0]
    enc = q(jnp.transpose(encoder_outputs, (1, 0, 2)))           # (B,L,H)

    wih = q(jnp.concatenate(list(params["w_ih"]), axis=1))       # (H,3H)
    whh = q(jnp.concatenate(list(params["w_hh"]), axis=1))
    bih = jnp.concatenate(list(params["b_ih"]))[None]
    bhh = jnp.concatenate(list(params["b_hh"]))[None]

    gx = x @ wih + bih
    gh = q(h) @ whh + bhh
    r = jax.nn.sigmoid(gx[:, :H] + gh[:, :H])
    z = jax.nn.sigmoid(gx[:, H:2 * H] + gh[:, H:2 * H])
    n = jnp.tanh(gx[:, 2 * H:] + r * gh[:, 2 * H:])
    h_new = (1.0 - z) * n + z * h

    energies = jnp.einsum('bh,blh->bl', q(h_new), enc)
    attn = jax.nn.softmax(energies, axis=1)
    context = jnp.einsum('bl,blh->bh', q(attn), enc)

    cat = q(jnp.concatenate([h_new, context], axis=1))
    concat_out = jnp.tanh(cat @ q(params["w_concat"]) + params["b_concat"][None])
    logits = q(concat_out) @ q(params["w_out"]) + params["b_out"][None]
    return jax.nn.softmax(logits, axis=1), h_new[None]


if __name__ == "__main__":
    # small shapes consistent with the module's forward
    B, H, L, VOCAB = 2, 32, 8, 16        # batch, hidden, max src len, vocab(=output_size)

    key = jax.random.PRNGKey(0)
    kp_, k1, k2, k3 = jax.random.split(key, 4)
    params = init_params(kp_, VOCAB, H, VOCAB)
    packed = pack_params(params)

    input_seq = jax.random.randint(k1, (1, B), 0, VOCAB, dtype=jnp.int32)      # (1,B)
    last_hidden = jax.random.normal(k2, (1, B, H), jnp.float32)                # (1,B,H)
    encoder_outputs = jax.random.normal(k3, (L, B, H), jnp.float32)            # (L,B,H)

    out, hidden = jax.block_until_ready(
        luong_attn_decoder_forward(packed, input_seq, last_hidden, encoder_outputs))
    ref_out, ref_hidden = reference_forward(params, input_seq, last_hidden, encoder_outputs)

    np.testing.assert_allclose(np.asarray(out), np.asarray(ref_out), rtol=1e-2, atol=1e-2)
    np.testing.assert_allclose(np.asarray(hidden), np.asarray(ref_hidden), rtol=1e-2, atol=1e-2)
    assert out.shape == (B, VOCAB) and hidden.shape == (1, B, H)

    print("KERNEL_OK")
</pallas_src>

<mosaic_0001>
module attributes {stable_mosaic.version = 11 : i64} {
  func.func @luong_decoder_kernel(%arg0: i32, %arg1: memref<8x128xbf16, #tpu.memory_space<vmem>>, %arg2: memref<8x128xf32, #tpu.memory_space<vmem>>, %arg3: memref<8x8x128xbf16, #tpu.memory_space<vmem>>, %arg4: memref<128x384xbf16, #tpu.memory_space<vmem>>, %arg5: memref<128x384xbf16, #tpu.memory_space<vmem>>, %arg6: memref<1x384xf32, #tpu.memory_space<vmem>>, %arg7: memref<1x384xf32, #tpu.memory_space<vmem>>, %arg8: memref<256x128xbf16, #tpu.memory_space<vmem>>, %arg9: memref<1x128xf32, #tpu.memory_space<vmem>>, %arg10: memref<128x128xbf16, #tpu.memory_space<vmem>>, %arg11: memref<1x128xf32, #tpu.memory_space<vmem>>, %arg12: memref<8x128xf32, #tpu.memory_space<vmem>>, %arg13: memref<8x128xf32, #tpu.memory_space<vmem>>, %arg14: memref<8x1xf32, #tpu.memory_space<vmem>>, %arg15: memref<8x1xf32, #tpu.memory_space<vmem>>, %arg16: memref<8x128xbf16, #tpu.memory_space<vmem>>) attributes {dimension_semantics = [#tpu.dimension_semantics<arbitrary>], iteration_bounds = array<i64: 1>, scalar_prefetch = 0 : i64, scratch_operands = 1 : i64, tpu.core_type = #tpu.core_type<tc>, window_params = [{pipeline_mode = #tpu.pipeline_mode<synchronous>, transform_indices = @transform_0, window_bounds = array<i64: 8, 128>}, {pipeline_mode = #tpu.pipeline_mode<synchronous>, transform_indices = @transform_1, window_bounds = array<i64: 8, 128>}, {pipeline_mode = #tpu.pipeline_mode<synchronous>, transform_indices = @transform_2, window_bounds = array<i64: 8, 8, 128>}, {pipeline_mode = #tpu.pipeline_mode<synchronous>, transform_indices = @transform_3, window_bounds = array<i64: 128, 384>}, {pipeline_mode = #tpu.pipeline_mode<synchronous>, transform_indices = @transform_4, window_bounds = array<i64: 128, 384>}, {pipeline_mode = #tpu.pipeline_mode<synchronous>, transform_indices = @transform_5, window_bounds = array<i64: 1, 384>}, {pipeline_mode = #tpu.pipeline_mode<synchronous>, transform_indices = @transform_6, window_bounds = array<i64: 1, 384>}, {pipeline_mode = #tpu.pipeline_mode<synchronous>, transform_indices = @transform_7, window_bounds = array<i64: 256, 128>}, {pipeline_mode = #tpu.pipeline_mode<synchronous>, transform_indices = @transform_8, window_bounds = array<i64: 1, 128>}, {transform_indices = @transform_9, window_bounds = array<i64: 128, 128>}, {transform_indices = @transform_10, window_bounds = array<i64: 1, 128>}, {transform_indices = @transform_11, window_bounds = array<i64: 8, 128>}, {pipeline_mode = #tpu.pipeline_mode<synchronous>, transform_indices = @transform_12, window_bounds = array<i64: 8, 128>}, {pipeline_mode = #tpu.pipeline_mode<synchronous>, transform_indices = @transform_13, window_bounds = array<i64: 8, 1>}, {pipeline_mode = #tpu.pipeline_mode<synchronous>, transform_indices = @transform_14, window_bounds = array<i64: 8, 1>}]} {
    %c0_i32 = arith.constant 0 : i32
    %0 = arith.cmpi eq, %arg0, %c0_i32 : i32
    %1 = arith.extui %0 : i1 to i32
    %c0_i32_0 = arith.constant 0 : i32
    %2 = arith.cmpi ne, %1, %c0_i32_0 : i32
    scf.if %2 {
      %c0_18 = arith.constant 0 : index
      %c0_19 = arith.constant 0 : index
      %26 = vector.load %arg1[%c0_18, %c0_19] : memref<8x128xbf16, #tpu.memory_space<vmem>>, vector<8x128xbf16>
      %c0_20 = arith.constant 0 : index
      %c0_21 = arith.constant 0 : index
      %27 = vector.load %arg2[%c0_20, %c0_21] : memref<8x128xf32, #tpu.memory_space<vmem>>, vector<8x128xf32>
      %c0_22 = arith.constant 0 : index
      %c0_23 = arith.constant 0 : index
      %c0_24 = arith.constant 0 : index
      %28 = vector.load %arg3[%c0_22, %c0_23, %c0_24] : memref<8x8x128xbf16, #tpu.memory_space<vmem>>, vector<8x8x128xbf16>
      %c0_25 = arith.constant 0 : index
      %c0_26 = arith.constant 0 : index
      %29 = vector.load %arg4[%c0_25, %c0_26] : memref<128x384xbf16, #tpu.memory_space<vmem>>, vector<128x384xbf16>
      %cst_27 = arith.constant dense<0.000000e+00> : vector<8x384xf32>
      %30 = tpu.matmul %26, %29, %cst_27 {dimension_numbers = #tpu.dot_dimension_numbers<[1], [0], [0], [1], [0, 0, 1, 1], [], []>} : vector<8x128xbf16>, vector<128x384xbf16>, vector<8x384xf32> -> vector<8x384xf32>
      %c0_28 = arith.constant 0 : index
      %c0_29 = arith.constant 0 : index
      %31 = vector.load %arg6[%c0_28, %c0_29] : memref<1x384xf32, #tpu.memory_space<vmem>>, vector<1x384xf32>
      %32 = vector.broadcast %31 : vector<1x384xf32> to vector<8x384xf32>
      %33 = arith.addf %30, %32 : vector<8x384xf32>
      %34 = arith.truncf %27 : vector<8x128xf32> to vector<8x128xbf16>
      %c0_30 = arith.constant 0 : index
      %c0_31 = arith.constant 0 : index
      %35 = vector.load %arg5[%c0_30, %c0_31] : memref<128x384xbf16, #tpu.memory_space<vmem>>, vector<128x384xbf16>
      %cst_32 = arith.constant dense<0.000000e+00> : vector<8x384xf32>
      %36 = tpu.matmul %34, %35, %cst_32 {dimension_numbers = #tpu.dot_dimension_numbers<[1], [0], [0], [1], [0, 0, 1, 1], [], []>} : vector<8x128xbf16>, vector<128x384xbf16>, vector<8x384xf32> -> vector<8x384xf32>
      %c0_33 = arith.constant 0 : index
      %c0_34 = arith.constant 0 : index
      %37 = vector.load %arg7[%c0_33, %c0_34] : memref<1x384xf32, #tpu.memory_space<vmem>>, vector<1x384xf32>
      %38 = vector.broadcast %37 : vector<1x384xf32> to vector<8x384xf32>
      %39 = arith.addf %36, %38 : vector<8x384xf32>
      %40 = vector.extract_strided_slice %33 {offsets = [0, 0], sizes = [8, 128], strides = [1, 1]} : vector<8x384xf32> to vector<8x128xf32>
      %41 = vector.extract_strided_slice %39 {offsets = [0, 0], sizes = [8, 128], strides = [1, 1]} : vector<8x384xf32> to vector<8x128xf32>
      %42 = arith.addf %40, %41 : vector<8x128xf32>
      %43 = arith.negf %42 : vector<8x128xf32>
      %44 = math.exp %43 : vector<8x128xf32>
      %cst_35 = arith.constant 1.000000e+00 : f32
      %45 = vector.broadcast %cst_35 : f32 to vector<8x128xf32>
      %46 = arith.addf %45, %44 : vector<8x128xf32>
      %47 = arith.divf %45, %46 : vector<8x128xf32>
      %48 = vector.extract_strided_slice %33 {offsets = [0, 128], sizes = [8, 128], strides = [1, 1]} : vector<8x384xf32> to vector<8x128xf32>
      %49 = vector.extract_strided_slice %39 {offsets = [0, 128], sizes = [8, 128], strides = [1, 1]} : vector<8x384xf32> to vector<8x128xf32>
      %50 = arith.addf %48, %49 : vector<8x128xf32>
      %51 = arith.negf %50 : vector<8x128xf32>
      %52 = math.exp %51 : vector<8x128xf32>
      %cst_36 = arith.constant 1.000000e+00 : f32
      %53 = vector.broadcast %cst_36 : f32 to vector<8x128xf32>
      %54 = arith.addf %53, %52 : vector<8x128xf32>
      %55 = arith.divf %53, %54 : vector<8x128xf32>
      %56 = vector.extract_strided_slice %33 {offsets = [0, 256], sizes = [8, 128], strides = [1, 1]} : vector<8x384xf32> to vector<8x128xf32>
      %57 = vector.extract_strided_slice %39 {offsets = [0, 256], sizes = [8, 128], strides = [1, 1]} : vector<8x384xf32> to vector<8x128xf32>
      %58 = arith.mulf %47, %57 : vector<8x128xf32>
      %59 = arith.addf %56, %58 : vector<8x128xf32>
      %60 = math.tanh %59 : vector<8x128xf32>
      %cst_37 = arith.constant 1.000000e+00 : f32
      %61 = vector.broadcast %cst_37 : f32 to vector<8x128xf32>
      %62 = arith.subf %61, %55 : vector<8x128xf32>
      %63 = arith.mulf %62, %60 : vector<8x128xf32>
      %64 = arith.mulf %55, %27 : vector<8x128xf32>
      %65 = arith.addf %63, %64 : vector<8x128xf32>
      %66 = arith.truncf %65 : vector<8x128xf32> to vector<8x128xbf16>
      %67 = vector.shape_cast %66 : vector<8x128xbf16> to vector<8x1x128xbf16>
      "tpu.trace_start"() <{level = 10 : i32, message = "bqh,blh->bql"}> : () -> ()
      %cst_38 = arith.constant dense<0.000000e+00> : vector<8x1x8xf32>
      %68 = tpu.matmul %67, %28, %cst_38 {dimension_numbers = #tpu.dot_dimension_numbers<[2], [2], [1], [1], [0, 0, 0, 1, 1, 1], [0], [0]>} : vector<8x1x128xbf16>, vector<8x8x128xbf16>, vector<8x1x8xf32> -> vector<8x1x8xf32>
      "tpu.trace_stop"() : () -> ()
      %cst_39 = arith.constant dense<0xFF800000> : vector<8x1xf32>
      %69 = vector.multi_reduction <maximumf>, %68, %cst_39 [2] : vector<8x1x8xf32> to vector<8x1xf32>
      %70 = vector.shape_cast %69 : vector<8x1xf32> to vector<8x1x1xf32>
      %71 = vector.broadcast %70 : vector<8x1x1xf32> to vector<8x1x8xf32>
      %72 = arith.subf %68, %71 : vector<8x1x8xf32>
      %73 = math.exp %72 : vector<8x1x8xf32>
      %cst_40 = arith.constant dense<0.000000e+00> : vector<8x1xf32>
      %74 = vector.multi_reduction <add>, %73, %cst_40 [2] : vector<8x1x8xf32> to vector<8x1xf32>
      %75 = vector.shape_cast %74 : vector<8x1xf32> to vector<8x1x1xf32>
      %76 = tpu.reciprocal %75 {approx = true} : vector<8x1x1xf32> -> vector<8x1x1xf32>
      %77 = vector.broadcast %76 : vector<8x1x1xf32> to vector<8x1x8xf32>
      %78 = arith.mulf %73, %77 : vector<8x1x8xf32>
      %79 = arith.truncf %78 : vector<8x1x8xf32> to vector<8x1x8xbf16>
      "tpu.trace_start"() <{level = 10 : i32, message = "bql,blh->bqh"}> : () -> ()
      %cst_41 = arith.constant dense<0.000000e+00> : vector<8x1x128xf32>
      %80 = tpu.matmul %79, %28, %cst_41 {dimension_numbers = #tpu.dot_dimension_numbers<[2], [1], [1], [2], [0, 0, 0, 1, 1, 2], [0], [0]>} : vector<8x1x8xbf16>, vector<8x8x128xbf16>, vector<8x1x128xf32> -> vector<8x1x128xf32>
      "tpu.trace_stop"() : () -> ()
      %81 = vector.shape_cast %80 : vector<8x1x128xf32> to vector<8x128xf32>
      %82 = tpu.concatenate %65, %81 in 1 : vector<8x128xf32>, vector<8x128xf32> -> vector<8x256xf32>
      %83 = arith.truncf %82 : vector<8x256xf32> to vector<8x256xbf16>
      %c0_42 = arith.constant 0 : index
      %c0_43 = arith.constant 0 : index
      %84 = vector.load %arg8[%c0_42, %c0_43] : memref<256x128xbf16, #tpu.memory_space<vmem>>, vector<256x128xbf16>
      %cst_44 = arith.constant dense<0.000000e+00> : vector<8x128xf32>
      %85 = tpu.matmul %83, %84, %cst_44 {dimension_numbers = #tpu.dot_dimension_numbers<[1], [0], [0], [1], [0, 0, 1, 1], [], []>} : vector<8x256xbf16>, vector<256x128xbf16>, vector<8x128xf32> -> vector<8x128xf32>
      %c0_45 = arith.constant 0 : index
      %c0_46 = arith.constant 0 : index
      %86 = vector.load %arg9[%c0_45, %c0_46] : memref<1x128xf32, #tpu.memory_space<vmem>>, vector<1x128xf32>
      %87 = vector.broadcast %86 : vector<1x128xf32> to vector<8x128xf32>
      %88 = arith.addf %85, %87 : vector<8x128xf32>
      %89 = math.tanh %88 : vector<8x128xf32>
      %c0_47 = arith.constant 0 : index
      %c0_48 = arith.constant 0 : index
      %90 = vector.load %arg13[%c0_47, %c0_48] : memref<8x128xf32, #tpu.memory_space<vmem>>, vector<8x128xf32>
      tpu.vector_store %arg13[%c0_47, %c0_48], %65 {strides = array<i32>} : memref<8x128xf32, #tpu.memory_space<vmem>>, vector<8x128xf32>,
      %91 = arith.truncf %89 : vector<8x128xf32> to vector<8x128xbf16>
      %c0_49 = arith.constant 0 : index
      %c0_50 = arith.constant 0 : index
      %92 = vector.load %arg16[%c0_49, %c0_50] : memref<8x128xbf16, #tpu.memory_space<vmem>>, vector<8x128xbf16>
      tpu.vector_store %arg16[%c0_49, %c0_50], %91 {strides = array<i32>} : memref<8x128xbf16, #tpu.memory_space<vmem>>, vector<8x128xbf16>,
      %cst_51 = arith.constant -1.000000e+30 : f32
      %93 = vector.broadcast %cst_51 : f32 to vector<8x1xf32>
      %c0_52 = arith.constant 0 : index
      %c0_53 = arith.constant 0 : index
      %94 = vector.load %arg14[%c0_52, %c0_53] : memref<8x1xf32, #tpu.memory_space<vmem>>, vector<8x1xf32>
      tpu.vector_store %arg14[%c0_52, %c0_53], %93 {strides = array<i32>} : memref<8x1xf32, #tpu.memory_space<vmem>>, vector<8x1xf32>,
      %cst_54 = arith.constant 0.000000e+00 : f32
      %95 = vector.broadcast %cst_54 : f32 to vector<8x1xf32>
      %c0_55 = arith.constant 0 : index
      %c0_56 = arith.constant 0 : index
      %96 = vector.load %arg15[%c0_55, %c0_56] : memref<8x1xf32, #tpu.memory_space<vmem>>, vector<8x1xf32>
      tpu.vector_store %arg15[%c0_55, %c0_56], %95 {strides = array<i32>} : memref<8x1xf32, #tpu.memory_space<vmem>>, vector<8x1xf32>,
    } else {
    }
    %c0 = arith.constant 0 : index
    %c0_1 = arith.constant 0 : index
    %3 = vector.load %arg16[%c0, %c0_1] : memref<8x128xbf16, #tpu.memory_space<vmem>>, vector<8x128xbf16>
    %c0_2 = arith.constant 0 : index
    %c0_3 = arith.constant 0 : index
    %4 = vector.load %arg10[%c0_2, %c0_3] : memref<128x128xbf16, #tpu.memory_space<vmem>>, vector<128x128xbf16>
    %cst = arith.constant dense<0.000000e+00> : vector<8x128xf32>
    %5 = tpu.matmul %3, %4, %cst {dimension_numbers = #tpu.dot_dimension_numbers<[1], [0], [0], [1], [0, 0, 1, 1], [], []>} : vector<8x128xbf16>, vector<128x128xbf16>, vector<8x128xf32> -> vector<8x128xf32>
    %c0_4 = arith.constant 0 : index
    %c0_5 = arith.constant 0 : index
    %6 = vector.load %arg11[%c0_4, %c0_5] : memref<1x128xf32, #tpu.memory_space<vmem>>, vector<1x128xf32>
    %7 = vector.broadcast %6 : vector<1x128xf32> to vector<8x128xf32>
    %8 = arith.addf %5, %7 : vector<8x128xf32>
    %c0_6 = arith.constant 0 : index
    %c0_7 = arith.constant 0 : index
    %9 = vector.load %arg12[%c0_6, %c0_7] : memref<8x128xf32, #tpu.memory_space<vmem>>, vector<8x128xf32>
    tpu.vector_store %arg12[%c0_6, %c0_7], %8 {strides = array<i32>} : memref<8x128xf32, #tpu.memory_space<vmem>>, vector<8x128xf32>,
    %c0_8 = arith.constant 0 : index
    %c0_9 = arith.constant 0 : index
    %10 = vector.load %arg14[%c0_8, %c0_9] : memref<8x1xf32, #tpu.memory_space<vmem>>, vector<8x1xf32>
    %cst_10 = arith.constant dense<0xFF800000> : vector<8xf32>
    %11 = vector.multi_reduction <maximumf>, %8, %cst_10 [1] : vector<8x128xf32> to vector<8xf32>
    %12 = vector.shape_cast %11 : vector<8xf32> to vector<8x1xf32>
    %13 = arith.maximumf %10, %12 : vector<8x1xf32>
    %c0_11 = arith.constant 0 : index
    %c0_12 = arith.constant 0 : index
    %14 = vector.load %arg15[%c0_11, %c0_12] : memref<8x1xf32, #tpu.memory_space<vmem>>, vector<8x1xf32>
    %15 = arith.subf %10, %13 : vector<8x1xf32>
    %16 = math.exp %15 : vector<8x1xf32>
    %17 = arith.mulf %14, %16 : vector<8x1xf32>
    %18 = vector.broadcast %13 : vector<8x1xf32> to vector<8x128xf32>
    %19 = arith.subf %8, %18 : vector<8x128xf32>
    %20 = math.exp %19 : vector<8x128xf32>
    %cst_13 = arith.constant dense<0.000000e+00> : vector<8xf32>
    %21 = vector.multi_reduction <add>, %20, %cst_13 [1] : vector<8x128xf32> to vector<8xf32>
    %22 = vector.shape_cast %21 : vector<8xf32> to vector<8x1xf32>
    %23 = arith.addf %17, %22 : vector<8x1xf32>
    %c0_14 = arith.constant 0 : index
    %c0_15 = arith.constant 0 : index
    %24 = vector.load %arg15[%c0_14, %c0_15] : memref<8x1xf32, #tpu.memory_space<vmem>>, vector<8x1xf32>
    tpu.vector_store %arg15[%c0_14, %c0_15], %23 {strides = array<i32>} : memref<8x1xf32, #tpu.memory_space<vmem>>, vector<8x1xf32>,
    %c0_16 = arith.constant 0 : index
    %c0_17 = arith.constant 0 : index
    %25 = vector.load %arg14[%c0_16, %c0_17] : memref<8x1xf32, #tpu.memory_space<vmem>>, vector<8x1xf32>
    tpu.vector_store %arg14[%c0_16, %c0_17], %13 {strides = array<i32>} : memref<8x1xf32, #tpu.memory_space<vmem>>, vector<8x1xf32>,
    return
  }
  func.func @transform_0(%arg0: i32) -> (i32, i32) {
    %c0_i32 = arith.constant 0 : i32
    %c0_i32_0 = arith.constant 0 : i32
    %c0_i32_1 = arith.constant 0 : i32
    return %c0_i32, %c0_i32_0 : i32, i32
  }
  func.func @transform_1(%arg0: i32) -> (i32, i32) {
    %c0_i32 = arith.constant 0 : i32
    %c0_i32_0 = arith.constant 0 : i32
    %c0_i32_1 = arith.constant 0 : i32
    return %c0_i32, %c0_i32_0 : i32, i32
  }
  func.func @transform_2(%arg0: i32) -> (i32, i32, i32) {
    %c0_i32 = arith.constant 0 : i32
    %c0_i32_0 = arith.constant 0 : i32
    %c0_i32_1 = arith.constant 0 : i32
    %c0_i32_2 = arith.constant 0 : i32
    return %c0_i32, %c0_i32_0, %c0_i32_1 : i32, i32, i32
  }
  func.func @transform_3(%arg0: i32) -> (i32, i32) {
    %c0_i32 = arith.constant 0 : i32
    %c0_i32_0 = arith.constant 0 : i32
    %c0_i32_1 = arith.constant 0 : i32
    return %c0_i32, %c0_i32_0 : i32, i32
  }
  func.func @transform_4(%arg0: i32) -> (i32, i32) {
    %c0_i32 = arith.constant 0 : i32
    %c0_i32_0 = arith.constant 0 : i32
    %c0_i32_1 = arith.constant 0 : i32
    return %c0_i32, %c0_i32_0 : i32, i32
  }
  func.func @transform_5(%arg0: i32) -> (i32, i32) {
    %c0_i32 = arith.constant 0 : i32
    %c0_i32_0 = arith.constant 0 : i32
    %c0_i32_1 = arith.constant 0 : i32
    return %c0_i32, %c0_i32_0 : i32, i32
  }
  func.func @transform_6(%arg0: i32) -> (i32, i32) {
    %c0_i32 = arith.constant 0 : i32
    %c0_i32_0 = arith.constant 0 : i32
    %c0_i32_1 = arith.constant 0 : i32
    return %c0_i32, %c0_i32_0 : i32, i32
  }
  func.func @transform_7(%arg0: i32) -> (i32, i32) {
    %c0_i32 = arith.constant 0 : i32
    %c0_i32_0 = arith.constant 0 : i32
    %c0_i32_1 = arith.constant 0 : i32
    return %c0_i32, %c0_i32_0 : i32, i32
  }
  func.func @transform_8(%arg0: i32) -> (i32, i32) {
    %c0_i32 = arith.constant 0 : i32
    %c0_i32_0 = arith.constant 0 : i32
    %c0_i32_1 = arith.constant 0 : i32
    return %c0_i32, %c0_i32_0 : i32, i32
  }
  func.func @transform_9(%arg0: i32) -> (i32, i32) {
    %c0_i32 = arith.constant 0 : i32
    %c0_i32_0 = arith.constant 0 : i32
    return %c0_i32, %arg0 : i32, i32
  }
  func.func @transform_10(%arg0: i32) -> (i32, i32) {
    %c0_i32 = arith.constant 0 : i32
    %c0_i32_0 = arith.constant 0 : i32
    return %c0_i32, %arg0 : i32, i32
  }
  func.func @transform_11(%arg0: i32) -> (i32, i32) {
    %c0_i32 = arith.constant 0 : i32
    %c0_i32_0 = arith.constant 0 : i32
    return %c0_i32, %arg0 : i32, i32
  }
  func.func @transform_12(%arg0: i32) -> (i32, i32) {
    %c0_i32 = arith.constant 0 : i32
    %c0_i32_0 = arith.constant 0 : i32
    %c0_i32_1 = arith.constant 0 : i32
    return %c0_i32, %c0_i32_0 : i32, i32
  }
  func.func @transform_13(%arg0: i32) -> (i32, i32) {
    %c0_i32 = arith.constant 0 : i32
    %c0_i32_0 = arith.constant 0 : i32
    %c0_i32_1 = arith.constant 0 : i32
    return %c0_i32, %c0_i32_0 : i32, i32
  }
  func.func @transform_14(%arg0: i32) -> (i32, i32) {
    %c0_i32 = arith.constant 0 : i32
    %c0_i32_0 = arith.constant 0 : i32
    %c0_i32_1 = arith.constant 0 : i32
    return %c0_i32, %c0_i32_0 : i32, i32
  }
}

</mosaic_0001>

<llo_original>
// kernel: tpu_custom_call.1
$region0: #{tpu_custom_call.1}
  #allocation0 [shape = 'u32[]', space=smem, size = 0x4, offset = 0x4, fixed_abs, tag = 'smem constant byte address 0x4 - core index']
  #allocation1 [shape = 'u32[144,128]{1,0:T(1,128)}', space=vmem, size = 0x12000, scoped, tag = 'internal scratch']
  #allocation2 [shape = 'bf16[8,128]{1,0:T(8,128)(2,1)}', space=vmem, size = 0x800, scoped, tag = 'scratch operand']
  %s0 = inlined_call_operand.hbm [shape: bf16[8,128], index: 0, kind: input, shape index: {}]
  %s1 = inlined_call_operand.hbm [shape: f32[8,128], index: 1, kind: input, shape index: {}]
  %s2 = inlined_call_operand.hbm [shape: bf16[8,8,128], index: 2, kind: input, shape index: {}]
  %s3 = inlined_call_operand.hbm [shape: bf16[128,384], index: 3, kind: input, shape index: {}]
  %s4 = inlined_call_operand.hbm [shape: bf16[128,384], index: 4, kind: input, shape index: {}]
  %s5 = inlined_call_operand.vmem [shape: f32[1,384], index: 5, kind: input, shape index: {}]
  %s6 = inlined_call_operand.vmem [shape: f32[1,384], index: 6, kind: input, shape index: {}]
  %s7 = inlined_call_operand.hbm [shape: bf16[256,128], index: 7, kind: input, shape index: {}]
  %s8 = inlined_call_operand.vmem [shape: f32[1,128], index: 8, kind: input, shape index: {}]
  %s9 = inlined_call_operand.hbm [shape: bf16[128,128], index: 9, kind: input, shape index: {}]
  %s10 = inlined_call_operand.vmem [shape: f32[1,128], index: 10, kind: input, shape index: {}]
  %s11 = inlined_call_operand.hbm [shape: f32[8,128], index: 11, kind: output, shape index: {0}]
  %s12 = inlined_call_operand.hbm [shape: f32[8,128], index: 12, kind: output, shape index: {1}]
  %s13 = inlined_call_operand.vmem [shape: f32[8,1], index: 13, kind: output, shape index: {2}]
  %s14 = inlined_call_operand.vmem [shape: f32[8,1], index: 14, kind: output, shape index: {3}]
  %15 = xla_tuple %s11, %s12, %s13, %s14
  %s16 = sld [smem:[#allocation0]]
  $region110: #{tpu_custom_call.1} parent=0
    _
  %s18 = ssub.s32 1, %s16
  %s19 = scalar_select 0, %s18, %s16
  $region1: #{tpu_custom_call.1} parent=0
    #allocation3 [shape = 'u8[2048]{0}', space=vmem, size = 0x800, scoped, tag = 'input window, operand 0, single buffered']
    #allocation4 [shape = 's32[1]{0}', space=sflag, size = 0x4, scoped, tag = 'scoped memory for tpu_custom_call.1']
    #allocation5 [shape = 's32[1]{0}', space=sflag, size = 0x4, scoped, tag = 'scoped memory for tpu_custom_call.1']
    #allocation6 [shape = 'u8[4096]{0}', space=vmem, size = 0x1000, scoped, tag = 'input window, operand 1, single buffered']
    #allocation7 [shape = 's32[1]{0}', space=sflag, size = 0x4, scoped, tag = 'scoped memory for tpu_custom_call.1']
    #allocation8 [shape = 'u8[16384]{0}', space=vmem, size = 0x4000, scoped, tag = 'input window, operand 2, single buffered']
    #allocation9 [shape = 'u8[98304]{0}', space=vmem, size = 0x18000, scoped, tag = 'input window, operand 3, single buffered']
    #allocation10 [shape = 's32[1]{0}', space=sflag, size = 0x4, scoped, tag = 'scoped memory for tpu_custom_call.1']
    #allocation11 [shape = 'u8[98304]{0}', space=vmem, size = 0x18000, scoped, tag = 'input window, operand 4, single buffered']
    #allocation12 [shape = 'u8[65536]{0}', space=vmem, size = 0x10000, scoped, tag = 'input window, operand 7, single buffered']
    #allocation13 [shape = 's32[1]{0}', space=sflag, size = 0x4, scoped, tag = 'scoped memory for tpu_custom_call.1']
    #allocation14 [shape = 'u8[32768]{0}', space=vmem, size = 0x8000, scoped, tag = 'input window, operand 9, single buffered']
    #allocation15 [shape = 'u8[4096]{0}', space=vmem, size = 0x1000, scoped, tag = 'output window, operand 0, single buffered']
    #allocation16 [shape = 'u8[4096]{0}', space=vmem, size = 0x1000, scoped, tag = 'output window, operand 1, single buffered']
    #allocation17 [shape = 's32[1]{0}', space=sflag, size = 0x4, scoped, tag = 'scoped memory for tpu_custom_call.1']
    %20 = vsyncpa [#allocation4], 0
    %21 = vsyncpa [#allocation7], 0
    %22 = vsyncpa [#allocation10], 0
    %23 = vsyncpa [#allocation13], 0
    %24 = vsyncpa [#allocation5], 0
    %25 = vsyncpa [#allocation17], 0
    // Predicated region
    $region2: #{tpu_custom_call.1} parent=1 // pred_check
      _
    $region3: #{tpu_custom_call.1} parent=1 // pred_check_branch
      %27 = sbr.rel (0) target = $region5
    $region4: #{tpu_custom_call.1} parent=1 // pred_region
      %s29 = ssub.s32 64, 64
      %30 = vsyncadd [#allocation4], %s29
      %s32 = sshll.u32 [#allocation3], 4
      %s33 = int_to_ptr.vmem [resolvable:$true] %s32
      %35 = dma.hbm_to_vmem [thread:$0]  %s0, 64, %s33, [#allocation4]
    $region5: #{tpu_custom_call.1} parent=1 // pred_fallthru
      _
    // Predicated region
    $region6: #{tpu_custom_call.1} parent=1 // pred_check
      _
    $region7: #{tpu_custom_call.1} parent=1 // pred_check_branch
      %37 = sbr.rel (0) target = $region9
    $region8: #{tpu_custom_call.1} parent=1 // pred_region
      %s39 = ssub.s32 128, 128
      %40 = vsyncadd [#allocation7], %s39
      %s42 = sshll.u32 [#allocation6], 4
      %s43 = int_to_ptr.vmem [resolvable:$true] %s42
      %45 = dma.hbm_to_vmem [thread:$0]  %s1, 128, %s43, [#allocation7]
    $region9: #{tpu_custom_call.1} parent=1 // pred_fallthru
      _
    // Predicated region
    $region10: #{tpu_custom_call.1} parent=1 // pred_check
      _
    $region11: #{tpu_custom_call.1} parent=1 // pred_check_branch
      %47 = sbr.rel (0) target = $region13
    $region12: #{tpu_custom_call.1} parent=1 // pred_region
      %s49 = ssub.s32 512, 512
      %50 = vsyncadd [#allocation7], %s49
      %s51 = sshll.u32 [#allocation8], 4
      %s52 = int_to_ptr.vmem [resolvable:$true] %s51
      %57 = dma.hbm_to_vmem [thread:$0]  %s2, 512, %s52, [#allocation7], 64, 64, 4
    $region13: #{tpu_custom_call.1} parent=1 // pred_fallthru
      _
    // Predicated region
    $region14: #{tpu_custom_call.1} parent=1 // pred_check
      _
    $region15: #{tpu_custom_call.1} parent=1 // pred_check_branch
      %59 = sbr.rel (0) target = $region17
    $region16: #{tpu_custom_call.1} parent=1 // pred_region
      %s61 = ssub.s32 3072, 3072
      %62 = vsyncadd [#allocation10], %s61
      %s63 = sshll.u32 [#allocation9], 4
      %s64 = int_to_ptr.vmem [resolvable:$true] %s63
      %69 = dma.hbm_to_vmem [thread:$0]  %s3, 3072, %s64, [#allocation10], 192, 192, 12
    $region17: #{tpu_custom_call.1} parent=1 // pred_fallthru
      _
    // Predicated region
    $region18: #{tpu_custom_call.1} parent=1 // pred_check
      _
    $region19: #{tpu_custom_call.1} parent=1 // pred_check_branch
      %71 = sbr.rel (0) target = $region21
    $region20: #{tpu_custom_call.1} parent=1 // pred_region
      %s73 = ssub.s32 3072, 3072
      %74 = vsyncadd [#allocation10], %s73
      %s75 = sshll.u32 [#allocation11], 4
      %s76 = int_to_ptr.vmem [resolvable:$true] %s75
      %81 = dma.hbm_to_vmem [thread:$0]  %s4, 3072, %s76, [#allocation10], 192, 192, 12
    $region21: #{tpu_custom_call.1} parent=1 // pred_fallthru
      _
    // Predicated region
    $region22: #{tpu_custom_call.1} parent=1 // pred_check
      _
    $region23: #{tpu_custom_call.1} parent=1 // pred_check_branch
      %83 = sbr.rel (0) target = $region25
    $region24: #{tpu_custom_call.1} parent=1 // pred_region
      _
    $region25: #{tpu_custom_call.1} parent=1 // pred_fallthru
      _
    // Predicated region
    $region26: #{tpu_custom_call.1} parent=1 // pred_check
      _
    $region27: #{tpu_custom_call.1} parent=1 // pred_check_branch
      %85 = sbr.rel (0) target = $region29
    $region28: #{tpu_custom_call.1} parent=1 // pred_region
      _
    $region29: #{tpu_custom_call.1} parent=1 // pred_fallthru
      _
    // Predicated region
    $region30: #{tpu_custom_call.1} parent=1 // pred_check
      _
    $region31: #{tpu_custom_call.1} parent=1 // pred_check_branch
      %87 = sbr.rel (0) target = $region33
    $region32: #{tpu_custom_call.1} parent=1 // pred_region
      %s89 = ssub.s32 2048, 2048
      %90 = vsyncadd [#allocation13], %s89
      %s91 = sshll.u32 [#allocation12], 4
      %s92 = int_to_ptr.vmem [resolvable:$true] %s91
      %97 = dma.hbm_to_vmem [thread:$0]  %s7, 2048, %s92, [#allocation13], 64, 64, 4
    $region33: #{tpu_custom_call.1} parent=1 // pred_fallthru
      _
    // Predicated region
    $region34: #{tpu_custom_call.1} parent=1 // pred_check
      _
    $region35: #{tpu_custom_call.1} parent=1 // pred_check_branch
      %99 = sbr.rel (0) target = $region37
    $region36: #{tpu_custom_call.1} parent=1 // pred_region
      _
    $region37: #{tpu_custom_call.1} parent=1 // pred_fallthru
      _
    // Predicated region
    $region38: #{tpu_custom_call.1} parent=1 // pred_check
      _
    $region39: #{tpu_custom_call.1} parent=1 // pred_check_branch
      %101 = sbr.rel (0) target = $region41
    $region40: #{tpu_custom_call.1} parent=1 // pred_region
      %s103 = ssub.s32 1024, 1024
      %104 = vsyncadd [#allocation13], %s103
      %s105 = sshll.u32 [#allocation14], 4
      %s106 = int_to_ptr.vmem [resolvable:$true] %s105
      %111 = dma.hbm_to_vmem [thread:$0]  %s9, 1024, %s106, [#allocation13], 64, 64, 4
    $region41: #{tpu_custom_call.1} parent=1 // pred_fallthru
      _
    // Predicated region
    $region42: #{tpu_custom_call.1} parent=1 // pred_check
      _
    $region43: #{tpu_custom_call.1} parent=1 // pred_check_branch
      %113 = sbr.rel (0) target = $region45
    $region44: #{tpu_custom_call.1} parent=1 // pred_region
      _
    $region45: #{tpu_custom_call.1} parent=1 // pred_fallthru
      _
    // Predicated region
    $region46: #{tpu_custom_call.1} parent=1 // pred_check
      _
    $region47: #{tpu_custom_call.1} parent=1 // pred_check_branch
      %115 = sbr.rel (0) target = $region49
    $region48: #{tpu_custom_call.1} parent=1 // pred_region
      %116 = dma.done [#allocation4], 64
    $region49: #{tpu_custom_call.1} parent=1 // pred_fallthru
      _
    // Predicated region
    $region50: #{tpu_custom_call.1} parent=1 // pred_check
      _
    $region51: #{tpu_custom_call.1} parent=1 // pred_check_branch
      %118 = sbr.rel (0) target = $region53
    $region52: #{tpu_custom_call.1} parent=1 // pred_region
      %119 = dma.done [#allocation7], 128
    $region53: #{tpu_custom_call.1} parent=1 // pred_fallthru
      _
    // Predicated region
    $region54: #{tpu_custom_call.1} parent=1 // pred_check
      _
    $region55: #{tpu_custom_call.1} parent=1 // pred_check_branch
      %121 = sbr.rel (0) target = $region57
    $region56: #{tpu_custom_call.1} parent=1 // pred_region
      %122 = dma.done [#allocation7], 512
    $region57: #{tpu_custom_call.1} parent=1 // pred_fallthru
      _
    // Predicated region
    $region58: #{tpu_custom_call.1} parent=1 // pred_check
      _
    $region59: #{tpu_custom_call.1} parent=1 // pred_check_branch
      %124 = sbr.rel (0) target = $region61
    $region60: #{tpu_custom_call.1} parent=1 // pred_region
      %125 = dma.done [#allocation10], 3072
    $region61: #{tpu_custom_call.1} parent=1 // pred_fallthru
      _
    // Predicated region
    $region62: #{tpu_custom_call.1} parent=1 // pred_check
      _
    $region63: #{tpu_custom_call.1} parent=1 // pred_check_branch
      %127 = sbr.rel (0) target = $region65
    $region64: #{tpu_custom_call.1} parent=1 // pred_region
      %128 = dma.done [#allocation10], 3072
    $region65: #{tpu_custom_call.1} parent=1 // pred_fallthru
      _
    // Predicated region
    $region66: #{tpu_custom_call.1} parent=1 // pred_check
      _
    $region67: #{tpu_custom_call.1} parent=1 // pred_check_branch
      %130 = sbr.rel (0) target = $region69
    $region68: #{tpu_custom_call.1} parent=1 // pred_region
      %131 = dma.done [#allocation13], 2048
    $region69: #{tpu_custom_call.1} parent=1 // pred_fallthru
      _
    // Predicated region
    $region70: #{tpu_custom_call.1} parent=1 // pred_check
      _
    $region71: #{tpu_custom_call.1} parent=1 // pred_check_branch
      %133 = sbr.rel (0) target = $region73
    $region72: #{tpu_custom_call.1} parent=1 // pred_region
      %134 = dma.done [#allocation13], 1024
    $region73: #{tpu_custom_call.1} parent=1 // pred_fallthru
      _
    %p136 = scmp.eq.s32.totalorder 0, 0
    // Predicated region
    $region74: #{tpu_custom_call.1} parent=1 // pred_check
      %p137 = pneg %p136
    $region75: #{tpu_custom_call.1} parent=1 // pred_check_branch
      %139 = sbr.rel (%p137) target = $region77
    $region76: #{tpu_custom_call.1} parent=1 // pred_region
      %v140 = vld [vmem:[#allocation3] sm:$0xf]
      %v141 = vld [vmem:[#allocation6] sm:$0xff]
      %v142 = vld [vmem:[#allocation8] sm:$0xf]
      %v143 = vld [vmem:[#allocation8 + $0x4] sm:$0xf]
      %v144 = vld [vmem:[#allocation8 + $0x8] sm:$0xf]
      %v145 = vld [vmem:[#allocation8 + $0xc] sm:$0xf]
      %v146 = vld [vmem:[#allocation8 + $0x10] sm:$0xf]
      %v147 = vld [vmem:[#allocation8 + $0x14] sm:$0xf]
      %v148 = vld [vmem:[#allocation8 + $0x18] sm:$0xf]
      %v149 = vld [vmem:[#allocation8 + $0x1c] sm:$0xf]
      %v150 = vld [vmem:[#allocation9] sm:$0xff]
      %v151 = vld [vmem:[#allocation9 + $0x8] sm:$0xf]
      %v152 = vld [vmem:[#allocation9 + $0xc] sm:$0xff]
      %v153 = vld [vmem:[#allocation9 + $0x14] sm:$0xf]
      %v154 = vld [vmem:[#allocation9 + $0x18] sm:$0xff]
      %v155 = vld [vmem:[#allocation9 + $0x20] sm:$0xf]
      %v156 = vld [vmem:[#allocation9 + $0x24] sm:$0xff]
      %v157 = vld [vmem:[#allocation9 + $0x2c] sm:$0xf]
      %v158 = vld [vmem:[#allocation9 + $0x30] sm:$0xff]
      %v159 = vld [vmem:[#allocation9 + $0x38] sm:$0xf]
      %v160 = vld [vmem:[#allocation9 + $0x3c] sm:$0xff]
      %v161 = vld [vmem:[#allocation9 + $0x44] sm:$0xf]
      %v162 = vld [vmem:[#allocation9 + $0x48] sm:$0xff]
      %v163 = vld [vmem:[#allocation9 + $0x50] sm:$0xf]
      %v164 = vld [vmem:[#allocation9 + $0x54] sm:$0xff]
      %v165 = vld [vmem:[#allocation9 + $0x5c] sm:$0xf]
      %v166 = vld [vmem:[#allocation9 + $0x60] sm:$0xff]
      %v167 = vld [vmem:[#allocation9 + $0x68] sm:$0xf]
      %v168 = vld [vmem:[#allocation9 + $0x6c] sm:$0xff]
      %v169 = vld [vmem:[#allocation9 + $0x74] sm:$0xf]
      %v170 = vld [vmem:[#allocation9 + $0x78] sm:$0xff]
      %v171 = vld [vmem:[#allocation9 + $0x80] sm:$0xf]
      %v172 = vld [vmem:[#allocation9 + $0x84] sm:$0xff]
      %v173 = vld [vmem:[#allocation9 + $0x8c] sm:$0xf]
      %v174 = vld [vmem:[#allocation9 + $0x90] sm:$0xff]
      %v175 = vld [vmem:[#allocation9 + $0x98] sm:$0xf]
      %v176 = vld [vmem:[#allocation9 + $0x9c] sm:$0xff]
      %v177 = vld [vmem:[#allocation9 + $0xa4] sm:$0xf]
      %v178 = vld [vmem:[#allocation9 + $0xa8] sm:$0xff]
      %v179 = vld [vmem:[#allocation9 + $0xb0] sm:$0xf]
      %v180 = vld [vmem:[#allocation9 + $0xb4] sm:$0xff]
      %v181 = vld [vmem:[#allocation9 + $0xbc] sm:$0xf]
      %v182 = vld [vmem:[%s5] sm:$0x7]
      %v184 = vlaneseq
      %v185 = vshrl.u32 %v184, 7
      %v186 = vsub.s32 0, %v185
      %v187 = vrot.slane %v182, %v186
      %v188 = vlaneseq
      %v189 = vshrl.u32 %v188, 7
      %v190 = vsub.s32 1, %v189
      %v191 = vrot.slane %v182, %v190
      %v192 = vlaneseq
      %v193 = vshrl.u32 %v192, 7
      %v194 = vsub.s32 2, %v193
      %v195 = vrot.slane %v182, %v194
      %v231 = vunpack.c.l.b16 %v150
      %v232 = vunpack.c.h.b16 %v150
      %v233 = vunpack.c.l.b16 %v151
      %v234 = vunpack.c.l.b16 %v152
      %v235 = vunpack.c.h.b16 %v152
      %v236 = vunpack.c.l.b16 %v153
      %v237 = vunpack.c.l.b16 %v154
      %v238 = vunpack.c.h.b16 %v154
      %v239 = vunpack.c.l.b16 %v155
      %v240 = vunpack.c.l.b16 %v156
      %v241 = vunpack.c.h.b16 %v156
      %v242 = vunpack.c.l.b16 %v157
      %v243 = vunpack.c.l.b16 %v158
      %v244 = vunpack.c.h.b16 %v158
      %v245 = vunpack.c.l.b16 %v159
      %v246 = vunpack.c.l.b16 %v160
      %v247 = vunpack.c.h.b16 %v160
      %v248 = vunpack.c.l.b16 %v161
      %v249 = vunpack.c.l.b16 %v162
      %v250 = vunpack.c.h.b16 %v162
      %v251 = vunpack.c.l.b16 %v163
      %v252 = vunpack.c.l.b16 %v164
      %v253 = vunpack.c.h.b16 %v164
      %v254 = vunpack.c.l.b16 %v165
      %v255 = vunpack.c.l.b16 %v166
      %v256 = vunpack.c.h.b16 %v166
      %v257 = vunpack.c.l.b16 %v167
      %v258 = vunpack.c.l.b16 %v168
      %v259 = vunpack.c.h.b16 %v168
      %v260 = vunpack.c.l.b16 %v169
      %v261 = vunpack.c.l.b16 %v170
      %v262 = vunpack.c.h.b16 %v170
      %v263 = vunpack.c.l.b16 %v171
      %v264 = vunpack.c.l.b16 %v172
      %v265 = vunpack.c.h.b16 %v172
      %v266 = vunpack.c.l.b16 %v173
      %v267 = vunpack.c.l.b16 %v174
      %v268 = vunpack.c.h.b16 %v174
      %v269 = vunpack.c.l.b16 %v175
      %v270 = vunpack.c.l.b16 %v176
      %v271 = vunpack.c.h.b16 %v176
      %v272 = vunpack.c.l.b16 %v177
      %v273 = vunpack.c.l.b16 %v178
      %v274 = vunpack.c.h.b16 %v178
      %v275 = vunpack.c.l.b16 %v179
      %v276 = vunpack.c.l.b16 %v180
      %v277 = vunpack.c.h.b16 %v180
      %v278 = vunpack.c.l.b16 %v181
      %v279 = vpack.c.b16 %v234, %v231
      %v280 = vpack.c.b16 %v235, %v232
      %v281 = vpack.c.b16 %v236, %v233
      %v282 = vpack.c.b16 %v240, %v237
      %v283 = vpack.c.b16 %v241, %v238
      %v284 = vpack.c.b16 %v242, %v239
      %v285 = vpack.c.b16 %v246, %v243
      %v286 = vpack.c.b16 %v247, %v244
      %v287 = vpack.c.b16 %v248, %v245
      %v288 = vpack.c.b16 %v252, %v249
      %v289 = vpack.c.b16 %v253, %v250
      %v290 = vpack.c.b16 %v254, %v251
      %v291 = vpack.c.b16 %v258, %v255
      %v292 = vpack.c.b16 %v259, %v256
      %v293 = vpack.c.b16 %v260, %v257
      %v294 = vpack.c.b16 %v264, %v261
      %v295 = vpack.c.b16 %v265, %v262
      %v296 = vpack.c.b16 %v266, %v263
      %v297 = vpack.c.b16 %v270, %v267
      %v298 = vpack.c.b16 %v271, %v268
      %v299 = vpack.c.b16 %v272, %v269
      %v300 = vpack.c.b16 %v276, %v273
      %v301 = vpack.c.b16 %v277, %v274
      %v302 = vpack.c.b16 %v278, %v275
      %327 = vmatprep.subr.bf16.mxu0 %v301
      %328 = vmatpush1.bf16.msra.mxu0 %v300
      %329 = vmatprep.subr.bf16.mxu0 %v298
      %330 = vmatpush1.bf16.msra.mxu0 %v297
      %331 = vmatprep.subr.bf16.mxu0 %v295
      %332 = vmatpush1.bf16.msra.mxu0 %v294
      %333 = vmatprep.subr.bf16.mxu0 %v292
      %334 = vmatpush1.bf16.msra.mxu0 %v291
      %335 = vmatprep.subr.bf16.mxu0 %v289
      %336 = vmatpush1.bf16.msra.mxu0 %v288
      %337 = vmatprep.subr.bf16.mxu0 %v286
      %338 = vmatpush1.bf16.msra.mxu0 %v285
      %339 = vmatprep.subr.bf16.mxu0 %v283
      %340 = vmatpush1.bf16.msra.mxu0 %v282
      %341 = vmatprep.subr.bf16.mxu0 %v280
      %342 = vmatpush1.bf16.msra.mxu0 %v279
      %343 = vmatprep.subr.bf16.mxu0 0
      %344 = vmatpush2.bf16.msra.mxu0 0
      %345 = vmatprep.subr.bf16.mxu0 0
      %346 = vmatpush2.bf16.msra.mxu0 0
      %347 = vmatprep.subr.bf16.mxu0 0
      %348 = vmatpush2.bf16.msra.mxu0 0
      %349 = vmatprep.subr.bf16.mxu0 0
      %350 = vmatpush2.bf16.msra.mxu0 0
      %351 = vmatprep.subr.bf16.mxu0 0
      %352 = vmatpush2.bf16.msra.mxu0 0
      %353 = vmatprep.subr.bf16.mxu0 0
      %354 = vmatpush2.bf16.msra.mxu0 0
      %355 = vmatprep.subr.bf16.mxu0 0
      %356 = vmatpush2.bf16.msra.mxu0 0
      %357 = vmatprep.subr.bf16.mxu0 0
      %358 = vmatpush2.bf16.msra.mxu0 0
      %359 = vmatprep.mubr.bf16.mxu0 0
      %360 = vmatmul.mubr.bf16.gmra.mxu0 %v140
      %v361 = vpop.f32.mrf.mxu0
      %v362 = vadd.f32 %v187, %v361
      %v363 = vpop.f32.mrf.mxu0
      %v364 = vadd.f32 %v191, %v363
      %v365 = vpop.f32.mrf.mxu0
      %v366 = vpop.f32.mrf.mxu0
      %367 = vdwg.mxu0
      %368 = vmatprep.subr.bf16.mxu0 0
      %369 = vmatpush1.bf16.msra.mxu0 %v302
      %370 = vmatprep.subr.bf16.mxu0 0
      %371 = vmatpush1.bf16.msra.mxu0 %v299
      %372 = vmatprep.subr.bf16.mxu0 0
      %373 = vmatpush1.bf16.msra.mxu0 %v296
      %374 = vmatprep.subr.bf16.mxu0 0
      %375 = vmatpush1.bf16.msra.mxu0 %v293
      %376 = vmatprep.subr.bf16.mxu0 0
      %377 = vmatpush1.bf16.msra.mxu0 %v290
      %378 = vmatprep.subr.bf16.mxu0 0
      %379 = vmatpush1.bf16.msra.mxu0 %v287
      %380 = vmatprep.subr.bf16.mxu0 0
      %381 = vmatpush1.bf16.msra.mxu0 %v284
      %382 = vmatprep.subr.bf16.mxu0 0
      %383 = vmatpush1.bf16.msra.mxu0 %v281
      %384 = vmatprep.subr.bf16.mxu0 0
      %385 = vmatpush2.bf16.msra.mxu0 0
      %386 = vmatprep.subr.bf16.mxu0 0
      %387 = vmatpush2.bf16.msra.mxu0 0
      %388 = vmatprep.subr.bf16.mxu0 0
      %389 = vmatpush2.bf16.msra.mxu0 0
      %390 = vmatprep.subr.bf16.mxu0 0
      %391 = vmatpush2.bf16.msra.mxu0 0
      %392 = vmatprep.subr.bf16.mxu0 0
      %393 = vmatpush2.bf16.msra.mxu0 0
      %394 = vmatprep.subr.bf16.mxu0 0
      %395 = vmatpush2.bf16.msra.mxu0 0
      %396 = vmatprep.subr.bf16.mxu0 0
      %397 = vmatpush2.bf16.msra.mxu0 0
      %398 = vmatprep.subr.bf16.mxu0 0
      %399 = vmatpush2.bf16.msra.mxu0 0
      %400 = vmatprep.mubr.bf16.mxu0 0
      %401 = vmatmul.mubr.bf16.gmra.mxu0 %v140
      %v402 = vpop.f32.mrf.mxu0
      %v403 = vadd.f32 %v195, %v402
      %v404 = vpop.f32.mrf.mxu0
      %v405 = vpop.f32.mrf.mxu0
      %v406 = vpop.f32.mrf.mxu0
      %407 = vdwg.mxu0
      %v408 = vpack.c.bf16 %v141, %v141
      %v409 = vld [vmem:[#allocation11] sm:$0xff]
      %v410 = vld [vmem:[#allocation11 + $0x8] sm:$0xf]
      %v411 = vld [vmem:[#allocation11 + $0xc] sm:$0xff]
      %v412 = vld [vmem:[#allocation11 + $0x14] sm:$0xf]
      %v413 = vld [vmem:[#allocation11 + $0x18] sm:$0xff]
      %v414 = vld [vmem:[#allocation11 + $0x20] sm:$0xf]
      %v415 = vld [vmem:[#allocation11 + $0x24] sm:$0xff]
      %v416 = vld [vmem:[#allocation11 + $0x2c] sm:$0xf]
      %v417 = vld [vmem:[#allocation11 + $0x30] sm:$0xff]
      %v418 = vld [vmem:[#allocation11 + $0x38] sm:$0xf]
      %v419 = vld [vmem:[#allocation11 + $0x3c] sm:$0xff]
      %v420 = vld [vmem:[#allocation11 + $0x44] sm:$0xf]
      %v421 = vld [vmem:[#allocation11 + $0x48] sm:$0xff]
      %v422 = vld [vmem:[#allocation11 + $0x50] sm:$0xf]
      %v423 = vld [vmem:[#allocation11 + $0x54] sm:$0xff]
      %v424 = vld [vmem:[#allocation11 + $0x5c] sm:$0xf]
      %v425 = vld [vmem:[#allocation11 + $0x60] sm:$0xff]
      %v426 = vld [vmem:[#allocation11 + $0x68] sm:$0xf]
      %v427 = vld [vmem:[#allocation11 + $0x6c] sm:$0xff]
      %v428 = vld [vmem:[#allocation11 + $0x74] sm:$0xf]
      %v429 = vld [vmem:[#allocation11 + $0x78] sm:$0xff]
      %v430 = vld [vmem:[#allocation11 + $0x80] sm:$0xf]
      %v431 = vld [vmem:[#allocation11 + $0x84] sm:$0xff]
      %v432 = vld [vmem:[#allocation11 + $0x8c] sm:$0xf]
      %v433 = vld [vmem:[#allocation11 + $0x90] sm:$0xff]
      %v434 = vld [vmem:[#allocation11 + $0x98] sm:$0xf]
      %v435 = vld [vmem:[#allocation11 + $0x9c] sm:$0xff]
      %v436 = vld [vmem:[#allocation11 + $0xa4] sm:$0xf]
      %v437 = vld [vmem:[#allocation11 + $0xa8] sm:$0xff]
      %v438 = vld [vmem:[#allocation11 + $0xb0] sm:$0xf]
      %v439 = vld [vmem:[#allocation11 + $0xb4] sm:$0xff]
      %v440 = vld [vmem:[#allocation11 + $0xbc] sm:$0xf]
      %v441 = vld [vmem:[%s6] sm:$0x7]
      %v443 = vlaneseq
      %v444 = vshrl.u32 %v443, 7
      %v445 = vsub.s32 0, %v444
      %v446 = vrot.slane %v441, %v445
      %v447 = vlaneseq
      %v448 = vshrl.u32 %v447, 7
      %v449 = vsub.s32 1, %v448
      %v450 = vrot.slane %v441, %v449
      %v451 = vlaneseq
      %v452 = vshrl.u32 %v451, 7
      %v453 = vsub.s32 2, %v452
      %v454 = vrot.slane %v441, %v453
      %v490 = vunpack.c.l.b16 %v409
      %v491 = vunpack.c.h.b16 %v409
      %v492 = vunpack.c.l.b16 %v410
      %v493 = vunpack.c.l.b16 %v411
      %v494 = vunpack.c.h.b16 %v411
      %v495 = vunpack.c.l.b16 %v412
      %v496 = vunpack.c.l.b16 %v413
      %v497 = vunpack.c.h.b16 %v413
      %v498 = vunpack.c.l.b16 %v414
      %v499 = vunpack.c.l.b16 %v415
      %v500 = vunpack.c.h.b16 %v415
      %v501 = vunpack.c.l.b16 %v416
      %v502 = vunpack.c.l.b16 %v417
      %v503 = vunpack.c.h.b16 %v417
      %v504 = vunpack.c.l.b16 %v418
      %v505 = vunpack.c.l.b16 %v419
      %v506 = vunpack.c.h.b16 %v419
      %v507 = vunpack.c.l.b16 %v420
      %v508 = vunpack.c.l.b16 %v421
      %v509 = vunpack.c.h.b16 %v421
      %v510 = vunpack.c.l.b16 %v422
      %v511 = vunpack.c.l.b16 %v423
      %v512 = vunpack.c.h.b16 %v423
      %v513 = vunpack.c.l.b16 %v424
      %v514 = vunpack.c.l.b16 %v425
      %v515 = vunpack.c.h.b16 %v425
      %v516 = vunpack.c.l.b16 %v426
      %v517 = vunpack.c.l.b16 %v427
      %v518 = vunpack.c.h.b16 %v427
      %v519 = vunpack.c.l.b16 %v428
      %v520 = vunpack.c.l.b16 %v429
      %v521 = vunpack.c.h.b16 %v429
      %v522 = vunpack.c.l.b16 %v430
      %v523 = vunpack.c.l.b16 %v431
      %v524 = vunpack.c.h.b16 %v431
      %v525 = vunpack.c.l.b16 %v432
      %v526 = vunpack.c.l.b16 %v433
      %v527 = vunpack.c.h.b16 %v433
      %v528 = vunpack.c.l.b16 %v434
      %v529 = vunpack.c.l.b16 %v435
      %v530 = vunpack.c.h.b16 %v435
      %v531 = vunpack.c.l.b16 %v436
      %v532 = vunpack.c.l.b16 %v437
      %v533 = vunpack.c.h.b16 %v437
      %v534 = vunpack.c.l.b16 %v438
      %v535 = vunpack.c.l.b16 %v439
      %v536 = vunpack.c.h.b16 %v439
      %v537 = vunpack.c.l.b16 %v440
      %v538 = vpack.c.b16 %v493, %v490
      %v539 = vpack.c.b16 %v494, %v491
      %v540 = vpack.c.b16 %v495, %v492
      %v541 = vpack.c.b16 %v499, %v496
      %v542 = vpack.c.b16 %v500, %v497
      %v543 = vpack.c.b16 %v501, %v498
      %v544 = vpack.c.b16 %v505, %v502
      %v545 = vpack.c.b16 %v506, %v503
      %v546 = vpack.c.b16 %v507, %v504
      %v547 = vpack.c.b16 %v511, %v508
      %v548 = vpack.c.b16 %v512, %v509
      %v549 = vpack.c.b16 %v513, %v510
      %v550 = vpack.c.b16 %v517, %v514
      %v551 = vpack.c.b16 %v518, %v515
      %v552 = vpack.c.b16 %v519, %v516
      %v553 = vpack.c.b16 %v523, %v520
      %v554 = vpack.c.b16 %v524, %v521
      %v555 = vpack.c.b16 %v525, %v522
      %v556 = vpack.c.b16 %v529, %v526
      %v557 = vpack.c.b16 %v530, %v527
      %v558 = vpack.c.b16 %v531, %v528
      %v559 = vpack.c.b16 %v535, %v532
      %v560 = vpack.c.b16 %v536, %v533
      %v561 = vpack.c.b16 %v537, %v534
      %586 = vmatprep.subr.bf16.mxu0 %v560
      %587 = vmatpush1.bf16.msra.mxu0 %v559
      %588 = vmatprep.subr.bf16.mxu0 %v557
      %589 = vmatpush1.bf16.msra.mxu0 %v556
      %590 = vmatprep.subr.bf16.mxu0 %v554
      %591 = vmatpush1.bf16.msra.mxu0 %v553
      %592 = vmatprep.subr.bf16.mxu0 %v551
      %593 = vmatpush1.bf16.msra.mxu0 %v550
      %594 = vmatprep.subr.bf16.mxu0 %v548
      %595 = vmatpush1.bf16.msra.mxu0 %v547
      %596 = vmatprep.subr.bf16.mxu0 %v545
      %597 = vmatpush1.bf16.msra.mxu0 %v544
      %598 = vmatprep.subr.bf16.mxu0 %v542
      %599 = vmatpush1.bf16.msra.mxu0 %v541
      %600 = vmatprep.subr.bf16.mxu0 %v539
      %601 = vmatpush1.bf16.msra.mxu0 %v538
      %602 = vmatprep.subr.bf16.mxu0 0
      %603 = vmatpush2.bf16.msra.mxu0 0
      %604 = vmatprep.subr.bf16.mxu0 0
      %605 = vmatpush2.bf16.msra.mxu0 0
      %606 = vmatprep.subr.bf16.mxu0 0
      %607 = vmatpush2.bf16.msra.mxu0 0
      %608 = vmatprep.subr.bf16.mxu0 0
      %609 = vmatpush2.bf16.msra.mxu0 0
      %610 = vmatprep.subr.bf16.mxu0 0
      %611 = vmatpush2.bf16.msra.mxu0 0
      %612 = vmatprep.subr.bf16.mxu0 0
      %613 = vmatpush2.bf16.msra.mxu0 0
      %614 = vmatprep.subr.bf16.mxu0 0
      %615 = vmatpush2.bf16.msra.mxu0 0
      %616 = vmatprep.subr.bf16.mxu0 0
      %617 = vmatpush2.bf16.msra.mxu0 0
      %618 = vmatprep.mubr.bf16.mxu0 0
      %619 = vmatmul.mubr.bf16.gmra.mxu0 %v408
      %v620 = vpop.f32.mrf.mxu0
      %v621 = vadd.f32 %v446, %v620
      %v622 = vpop.f32.mrf.mxu0
      %v623 = vadd.f32 %v450, %v622
      %v624 = vpop.f32.mrf.mxu0
      %v625 = vpop.f32.mrf.mxu0
      %626 = vdwg.mxu0
      %627 = vmatprep.subr.bf16.mxu0 0
      %628 = vmatpush1.bf16.msra.mxu0 %v561
      %629 = vmatprep.subr.bf16.mxu0 0
      %630 = vmatpush1.bf16.msra.mxu0 %v558
      %631 = vmatprep.subr.bf16.mxu0 0
      %632 = vmatpush1.bf16.msra.mxu0 %v555
      %633 = vmatprep.subr.bf16.mxu0 0
      %634 = vmatpush1.bf16.msra.mxu0 %v552
      %635 = vmatprep.subr.bf16.mxu0 0
      %636 = vmatpush1.bf16.msra.mxu0 %v549
      %637 = vmatprep.subr.bf16.mxu0 0
      %638 = vmatpush1.bf16.msra.mxu0 %v546
      %639 = vmatprep.subr.bf16.mxu0 0
      %640 = vmatpush1.bf16.msra.mxu0 %v543
      %641 = vmatprep.subr.bf16.mxu0 0
      %642 = vmatpush1.bf16.msra.mxu0 %v540
      %643 = vmatprep.subr.bf16.mxu0 0
      %644 = vmatpush2.bf16.msra.mxu0 0
      %645 = vmatprep.subr.bf16.mxu0 0
      %646 = vmatpush2.bf16.msra.mxu0 0
      %647 = vmatprep.subr.bf16.mxu0 0
      %648 = vmatpush2.bf16.msra.mxu0 0
      %649 = vmatprep.subr.bf16.mxu0 0
      %650 = vmatpush2.bf16.msra.mxu0 0
      %651 = vmatprep.subr.bf16.mxu0 0
      %652 = vmatpush2.bf16.msra.mxu0 0
      %653 = vmatprep.subr.bf16.mxu0 0
      %654 = vmatpush2.bf16.msra.mxu0 0
      %655 = vmatprep.subr.bf16.mxu0 0
      %656 = vmatpush2.bf16.msra.mxu0 0
      %657 = vmatprep.subr.bf16.mxu0 0
      %658 = vmatpush2.bf16.msra.mxu0 0
      %659 = vmatprep.mubr.bf16.mxu0 0
      %660 = vmatmul.mubr.bf16.gmra.mxu0 %v408
      %v661 = vpop.f32.mrf.mxu0
      %v662 = vadd.f32 %v454, %v661
      %v663 = vpop.f32.mrf.mxu0
      %v664 = vpop.f32.mrf.mxu0
      %v665 = vpop.f32.mrf.mxu0
      %666 = vdwg.mxu0
      %v667 = vadd.f32 %v362, %v621
      %v668 = vxor.u32 %v667, 2147483648
      %v669 = vmul.f32 %v668, 1.442695
      %v670 = vpow.pop %v669
      %v671 = vadd.f32 %v670, 1.0
      %v672 = vrcp.pop %v671
      %v673 = vmul.f32 1.0, %v672
      %v674 = vadd.f32 %v364, %v623
      %v675 = vxor.u32 %v674, 2147483648
      %v676 = vmul.f32 %v675, 1.442695
      %v677 = vpow.pop %v676
      %v678 = vadd.f32 %v677, 1.0
      %v679 = vrcp.pop %v678
      %v680 = vmul.f32 1.0, %v679
      %v681 = vmul.f32 %v673, %v662
      %v682 = vadd.f32 %v403, %v681
      %v683 = vtanh.pop %v682
      %v684 = vsub.f32 1.0, %v680
      %v685 = vmul.f32 %v684, %v683
      %v686 = vmul.f32 %v680, %v141
      %v687 = vadd.f32 %v685, %v686
      %v688 = vpack.c.bf16 %v687, %v687
      %v691 = vunpack.c.l.s4 1966171168
      %v692 = vunpack.c.0.s8 %v691
      %v693 = vlaneseq
      %v694 = vshrl.u32 %v693, 7
      %v695 = vsub.s32 %v692, %v694
      %v696 = vrot.slane %v688, %v695
      %v697 = vcombine.high %v696, %v696
      %v699 = vunpack.c.l.s4 1966171168
      %v700 = vunpack.c.0.s8 %v699
      %v701 = vlaneseq
      %v702 = vshrl.u32 %v701, 7
      %v703 = vsub.s32 %v700, %v702
      %v704 = vrot.slane %v696, %v703
      %v706 = vunpack.c.l.s4 1966171168
      %v707 = vunpack.c.0.s8 %v706
      %v708 = vlaneseq
      %v709 = vshrl.u32 %v708, 7
      %v710 = vsub.s32 %v707, %v709
      %v711 = vrot.slane %v697, %v710
      %v712 = vcombine.high %v704, %v704
      %v713 = vcombine.high %v711, %v711
      %v714 = vunpack.i.l.s16 %v704
      %v715 = vunpack.i.h.s16 %v704
      %v716 = vunpack.i.l.s16 %v711
      %v717 = vunpack.i.h.s16 %v711
      %v718 = vunpack.i.l.s16 %v712
      %v719 = vunpack.i.h.s16 %v712
      %v720 = vunpack.i.l.s16 %v713
      %v721 = vunpack.i.h.s16 %v713
      %v722 = vpack.i.b16 %v714, %v714
      %v723 = vlaneseq
      %v724 = vshrl.u32 %v723, 7
      %v725 = vsub.s32 0, %v724
      %v726 = vrot.slane %v722, %v725
      %728 = vmatprep.subr.bf16.mxu0 0
      %729 = vmatpush1.bf16.xpose.msra.mxu0 0
      %730 = vmatprep.subr.bf16.mxu0 0
      %731 = vmatpush1.bf16.xpose.msra.mxu0 0
      %732 = vmatprep.subr.bf16.mxu0 0
      %733 = vmatpush1.bf16.xpose.msra.mxu0 0
      %734 = vmatprep.subr.bf16.mxu0 0
      %735 = vmatpush1.bf16.xpose.msra.mxu0 0
      %736 = vmatprep.subr.bf16.mxu0 0
      %737 = vmatpush1.bf16.xpose.msra.mxu0 0
      %738 = vmatprep.subr.bf16.mxu0 0
      %739 = vmatpush1.bf16.xpose.msra.mxu0 0
      %740 = vmatprep.subr.bf16.mxu0 0
      %741 = vmatpush1.bf16.xpose.msra.mxu0 0
      %742 = vmatprep.subr.bf16.mxu0 0
      %743 = vmatpush1.bf16.xpose.msra.mxu0 %v142
      %744 = vmatprep.subr.bf16.mxu0 0
      %745 = vmatpush2.bf16.xpose.msra.mxu0 0
      %746 = vmatprep.subr.bf16.mxu0 0
      %747 = vmatpush2.bf16.xpose.msra.mxu0 0
      %748 = vmatprep.subr.bf16.mxu0 0
      %749 = vmatpush2.bf16.xpose.msra.mxu0 0
      %750 = vmatprep.subr.bf16.mxu0 0
      %751 = vmatpush2.bf16.xpose.msra.mxu0 0
      %752 = vmatprep.subr.bf16.mxu0 0
      %753 = vmatpush2.bf16.xpose.msra.mxu0 0
      %754 = vmatprep.subr.bf16.mxu0 0
      %755 = vmatpush2.bf16.xpose.msra.mxu0 0
      %756 = vmatprep.subr.bf16.mxu0 0
      %757 = vmatpush2.bf16.xpose.msra.mxu0 0
      %758 = vmatprep.subr.bf16.mxu0 0
      %759 = vmatpush2.bf16.xpose.msra.mxu0 0
      %760 = vmatprep.mubr.bf16.mxu0 0
      %761 = vmatmul.mubr.bf16.gmra.mxu0 %v726
      %v762 = vpop.f32.mrf.mxu0
      %v763 = vadd.f32 0.0, %v762
      %v764 = vpop.f32.mrf.mxu0
      %v765 = vpop.f32.mrf.mxu0
      %v766 = vpop.f32.mrf.mxu0
      %767 = vdwg.mxu0
      %v768 = vpack.i.b16 %v715, %v715
      %v769 = vlaneseq
      %v770 = vshrl.u32 %v769, 7
      %v771 = vsub.s32 0, %v770
      %v772 = vrot.slane %v768, %v771
      %774 = vmatprep.subr.bf16.mxu0 0
      %775 = vmatpush1.bf16.xpose.msra.mxu0 0
      %776 = vmatprep.subr.bf16.mxu0 0
      %777 = vmatpush1.bf16.xpose.msra.mxu0 0
      %778 = vmatprep.subr.bf16.mxu0 0
      %779 = vmatpush1.bf16.xpose.msra.mxu0 0
      %780 = vmatprep.subr.bf16.mxu0 0
      %781 = vmatpush1.bf16.xpose.msra.mxu0 0
      %782 = vmatprep.subr.bf16.mxu0 0
      %783 = vmatpush1.bf16.xpose.msra.mxu0 0
      %784 = vmatprep.subr.bf16.mxu0 0
      %785 = vmatpush1.bf16.xpose.msra.mxu0 0
      %786 = vmatprep.subr.bf16.mxu0 0
      %787 = vmatpush1.bf16.xpose.msra.mxu0 0
      %788 = vmatprep.subr.bf16.mxu0 0
      %789 = vmatpush1.bf16.xpose.msra.mxu0 %v143
      %790 = vmatprep.subr.bf16.mxu0 0
      %791 = vmatpush2.bf16.xpose.msra.mxu0 0
      %792 = vmatprep.subr.bf16.mxu0 0
      %793 = vmatpush2.bf16.xpose.msra.mxu0 0
      %794 = vmatprep.subr.bf16.mxu0 0
      %795 = vmatpush2.bf16.xpose.msra.mxu0 0
      %796 = vmatprep.subr.bf16.mxu0 0
      %797 = vmatpush2.bf16.xpose.msra.mxu0 0
      %798 = vmatprep.subr.bf16.mxu0 0
      %799 = vmatpush2.bf16.xpose.msra.mxu0 0
      %800 = vmatprep.subr.bf16.mxu0 0
      %801 = vmatpush2.bf16.xpose.msra.mxu0 0
      %802 = vmatprep.subr.bf16.mxu0 0
      %803 = vmatpush2.bf16.xpose.msra.mxu0 0
      %804 = vmatprep.subr.bf16.mxu0 0
      %805 = vmatpush2.bf16.xpose.msra.mxu0 0
      %806 = vmatprep.mubr.bf16.mxu0 0
      %807 = vmatmul.mubr.bf16.gmra.mxu0 %v772
      %v808 = vpop.f32.mrf.mxu0
      %v809 = vadd.f32 0.0, %v808
      %v810 = vpop.f32.mrf.mxu0
      %v811 = vpop.f32.mrf.mxu0
      %v812 = vpop.f32.mrf.mxu0
      %813 = vdwg.mxu0
      %v814 = vpack.i.b16 %v716, %v716
      %v815 = vlaneseq
      %v816 = vshrl.u32 %v815, 7
      %v817 = vsub.s32 0, %v816
      %v818 = vrot.slane %v814, %v817
      %820 = vmatprep.subr.bf16.mxu0 0
      %821 = vmatpush1.bf16.xpose.msra.mxu0 0
      %822 = vmatprep.subr.bf16.mxu0 0
      %823 = vmatpush1.bf16.xpose.msra.mxu0 0
      %824 = vmatprep.subr.bf16.mxu0 0
      %825 = vmatpush1.bf16.xpose.msra.mxu0 0
      %826 = vmatprep.subr.bf16.mxu0 0
      %827 = vmatpush1.bf16.xpose.msra.mxu0 0
      %828 = vmatprep.subr.bf16.mxu0 0
      %829 = vmatpush1.bf16.xpose.msra.mxu0 0
      %830 = vmatprep.subr.bf16.mxu0 0
      %831 = vmatpush1.bf16.xpose.msra.mxu0 0
      %832 = vmatprep.subr.bf16.mxu0 0
      %833 = vmatpush1.bf16.xpose.msra.mxu0 0
      %834 = vmatprep.subr.bf16.mxu0 0
      %835 = vmatpush1.bf16.xpose.msra.mxu0 %v144
      %836 = vmatprep.subr.bf16.mxu0 0
      %837 = vmatpush2.bf16.xpose.msra.mxu0 0
      %838 = vmatprep.subr.bf16.mxu0 0
      %839 = vmatpush2.bf16.xpose.msra.mxu0 0
      %840 = vmatprep.subr.bf16.mxu0 0
      %841 = vmatpush2.bf16.xpose.msra.mxu0 0
      %842 = vmatprep.subr.bf16.mxu0 0
      %843 = vmatpush2.bf16.xpose.msra.mxu0 0
      %844 = vmatprep.subr.bf16.mxu0 0
      %845 = vmatpush2.bf16.xpose.msra.mxu0 0
      %846 = vmatprep.subr.bf16.mxu0 0
      %847 = vmatpush2.bf16.xpose.msra.mxu0 0
      %848 = vmatprep.subr.bf16.mxu0 0
      %849 = vmatpush2.bf16.xpose.msra.mxu0 0
      %850 = vmatprep.subr.bf16.mxu0 0
      %851 = vmatpush2.bf16.xpose.msra.mxu0 0
      %852 = vmatprep.mubr.bf16.mxu0 0
      %853 = vmatmul.mubr.bf16.gmra.mxu0 %v818
      %v854 = vpop.f32.mrf.mxu0
      %v855 = vadd.f32 0.0, %v854
      %v856 = vpop.f32.mrf.mxu0
      %v857 = vpop.f32.mrf.mxu0
      %v858 = vpop.f32.mrf.mxu0
      %859 = vdwg.mxu0
      %v860 = vpack.i.b16 %v717, %v717
      %v861 = vlaneseq
      %v862 = vshrl.u32 %v861, 7
      %v863 = vsub.s32 0, %v862
      %v864 = vrot.slane %v860, %v863
      %866 = vmatprep.subr.bf16.mxu0 0
      %867 = vmatpush1.bf16.xpose.msra.mxu0 0
      %868 = vmatprep.subr.bf16.mxu0 0
      %869 = vmatpush1.bf16.xpose.msra.mxu0 0
      %870 = vmatprep.subr.bf16.mxu0 0
      %871 = vmatpush1.bf16.xpose.msra.mxu0 0
      %872 = vmatprep.subr.bf16.mxu0 0
      %873 = vmatpush1.bf16.xpose.msra.mxu0 0
      %874 = vmatprep.subr.bf16.mxu0 0
      %875 = vmatpush1.bf16.xpose.msra.mxu0 0
      %876 = vmatprep.subr.bf16.mxu0 0
      %877 = vmatpush1.bf16.xpose.msra.mxu0 0
      %878 = vmatprep.subr.bf16.mxu0 0
      %879 = vmatpush1.bf16.xpose.msra.mxu0 0
      %880 = vmatprep.subr.bf16.mxu0 0
      %881 = vmatpush1.bf16.xpose.msra.mxu0 %v145
      %882 = vmatprep.subr.bf16.mxu0 0
      %883 = vmatpush2.bf16.xpose.msra.mxu0 0
      %884 = vmatprep.subr.bf16.mxu0 0
      %885 = vmatpush2.bf16.xpose.msra.mxu0 0
      %886 = vmatprep.subr.bf16.mxu0 0
      %887 = vmatpush2.bf16.xpose.msra.mxu0 0
      %888 = vmatprep.subr.bf16.mxu0 0
      %889 = vmatpush2.bf16.xpose.msra.mxu0 0
      %890 = vmatprep.subr.bf16.mxu0 0
      %891 = vmatpush2.bf16.xpose.msra.mxu0 0
      %892 = vmatprep.subr.bf16.mxu0 0
      %893 = vmatpush2.bf16.xpose.msra.mxu0 0
      %894 = vmatprep.subr.bf16.mxu0 0
      %895 = vmatpush2.bf16.xpose.msra.mxu0 0
      %896 = vmatprep.subr.bf16.mxu0 0
      %897 = vmatpush2.bf16.xpose.msra.mxu0 0
      %898 = vmatprep.mubr.bf16.mxu0 0
      %899 = vmatmul.mubr.bf16.gmra.mxu0 %v864
      %v900 = vpop.f32.mrf.mxu0
      %v901 = vadd.f32 0.0, %v900
      %v902 = vpop.f32.mrf.mxu0
      %v903 = vpop.f32.mrf.mxu0
      %v904 = vpop.f32.mrf.mxu0
      %905 = vdwg.mxu0
      %v906 = vpack.i.b16 %v718, %v718
      %v907 = vlaneseq
      %v908 = vshrl.u32 %v907, 7
      %v909 = vsub.s32 0, %v908
      %v910 = vrot.slane %v906, %v909
      %912 = vmatprep.subr.bf16.mxu0 0
      %913 = vmatpush1.bf16.xpose.msra.mxu0 0
      %914 = vmatprep.subr.bf16.mxu0 0
      %915 = vmatpush1.bf16.xpose.msra.mxu0 0
      %916 = vmatprep.subr.bf16.mxu0 0
      %917 = vmatpush1.bf16.xpose.msra.mxu0 0
      %918 = vmatprep.subr.bf16.mxu0 0
      %919 = vmatpush1.bf16.xpose.msra.mxu0 0
      %920 = vmatprep.subr.bf16.mxu0 0
      %921 = vmatpush1.bf16.xpose.msra.mxu0 0
      %922 = vmatprep.subr.bf16.mxu0 0
      %923 = vmatpush1.bf16.xpose.msra.mxu0 0
      %924 = vmatprep.subr.bf16.mxu0 0
      %925 = vmatpush1.bf16.xpose.msra.mxu0 0
      %926 = vmatprep.subr.bf16.mxu0 0
      %927 = vmatpush1.bf16.xpose.msra.mxu0 %v146
      %928 = vmatprep.subr.bf16.mxu0 0
      %929 = vmatpush2.bf16.xpose.msra.mxu0 0
      %930 = vmatprep.subr.bf16.mxu0 0
      %931 = vmatpush2.bf16.xpose.msra.mxu0 0
      %932 = vmatprep.subr.bf16.mxu0 0
      %933 = vmatpush2.bf16.xpose.msra.mxu0 0
      %934 = vmatprep.subr.bf16.mxu0 0
      %935 = vmatpush2.bf16.xpose.msra.mxu0 0
      %936 = vmatprep.subr.bf16.mxu0 0
      %937 = vmatpush2.bf16.xpose.msra.mxu0 0
      %938 = vmatprep.subr.bf16.mxu0 0
      %939 = vmatpush2.bf16.xpose.msra.mxu0 0
      %940 = vmatprep.subr.bf16.mxu0 0
      %941 = vmatpush2.bf16.xpose.msra.mxu0 0
      %942 = vmatprep.subr.bf16.mxu0 0
      %943 = vmatpush2.bf16.xpose.msra.mxu0 0
      %944 = vmatprep.mubr.bf16.mxu0 0
      %945 = vmatmul.mubr.bf16.gmra.mxu0 %v910
      %v946 = vpop.f32.mrf.mxu0
      %v947 = vadd.f32 0.0, %v946
      %v948 = vpop.f32.mrf.mxu0
      %v949 = vpop.f32.mrf.mxu0
      %v950 = vpop.f32.mrf.mxu0
      %951 = vdwg.mxu0
      %v952 = vpack.i.b16 %v719, %v719
      %v953 = vlaneseq
      %v954 = vshrl.u32 %v953, 7
      %v955 = vsub.s32 0, %v954
      %v956 = vrot.slane %v952, %v955
      %958 = vmatprep.subr.bf16.mxu0 0
      %959 = vmatpush1.bf16.xpose.msra.mxu0 0
      %960 = vmatprep.subr.bf16.mxu0 0
      %961 = vmatpush1.bf16.xpose.msra.mxu0 0
      %962 = vmatprep.subr.bf16.mxu0 0
      %963 = vmatpush1.bf16.xpose.msra.mxu0 0
      %964 = vmatprep.subr.bf16.mxu0 0
      %965 = vmatpush1.bf16.xpose.msra.mxu0 0
      %966 = vmatprep.subr.bf16.mxu0 0
      %967 = vmatpush1.bf16.xpose.msra.mxu0 0
      %968 = vmatprep.subr.bf16.mxu0 0
      %969 = vmatpush1.bf16.xpose.msra.mxu0 0
      %970 = vmatprep.subr.bf16.mxu0 0
      %971 = vmatpush1.bf16.xpose.msra.mxu0 0
      %972 = vmatprep.subr.bf16.mxu0 0
      %973 = vmatpush1.bf16.xpose.msra.mxu0 %v147
      %974 = vmatprep.subr.bf16.mxu0 0
      %975 = vmatpush2.bf16.xpose.msra.mxu0 0
      %976 = vmatprep.subr.bf16.mxu0 0
      %977 = vmatpush2.bf16.xpose.msra.mxu0 0
      %978 = vmatprep.subr.bf16.mxu0 0
      %979 = vmatpush2.bf16.xpose.msra.mxu0 0
      %980 = vmatprep.subr.bf16.mxu0 0
      %981 = vmatpush2.bf16.xpose.msra.mxu0 0
      %982 = vmatprep.subr.bf16.mxu0 0
      %983 = vmatpush2.bf16.xpose.msra.mxu0 0
      %984 = vmatprep.subr.bf16.mxu0 0
      %985 = vmatpush2.bf16.xpose.msra.mxu0 0
      %986 = vmatprep.subr.bf16.mxu0 0
      %987 = vmatpush2.bf16.xpose.msra.mxu0 0
      %988 = vmatprep.subr.bf16.mxu0 0
      %989 = vmatpush2.bf16.xpose.msra.mxu0 0
      %990 = vmatprep.mubr.bf16.mxu0 0
      %991 = vmatmul.mubr.bf16.gmra.mxu0 %v956
      %v992 = vpop.f32.mrf.mxu0
      %v993 = vadd.f32 0.0, %v992
      %v994 = vpop.f32.mrf.mxu0
      %v995 = vpop.f32.mrf.mxu0
      %v996 = vpop.f32.mrf.mxu0
      %997 = vdwg.mxu0
      %v998 = vpack.i.b16 %v720, %v720
      %v999 = vlaneseq
      %v1000 = vshrl.u32 %v999, 7
      %v1001 = vsub.s32 0, %v1000
      %v1002 = vrot.slane %v998, %v1001
      %1004 = vmatprep.subr.bf16.mxu0 0
      %1005 = vmatpush1.bf16.xpose.msra.mxu0 0
      %1006 = vmatprep.subr.bf16.mxu0 0
      %1007 = vmatpush1.bf16.xpose.msra.mxu0 0
      %1008 = vmatprep.subr.bf16.mxu0 0
      %1009 = vmatpush1.bf16.xpose.msra.mxu0 0
      %1010 = vmatprep.subr.bf16.mxu0 0
      %1011 = vmatpush1.bf16.xpose.msra.mxu0 0
      %1012 = vmatprep.subr.bf16.mxu0 0
      %1013 = vmatpush1.bf16.xpose.msra.mxu0 0
      %1014 = vmatprep.subr.bf16.mxu0 0
      %1015 = vmatpush1.bf16.xpose.msra.mxu0 0
      %1016 = vmatprep.subr.bf16.mxu0 0
      %1017 = vmatpush1.bf16.xpose.msra.mxu0 0
      %1018 = vmatprep.subr.bf16.mxu0 0
      %1019 = vmatpush1.bf16.xpose.msra.mxu0 %v148
      %1020 = vmatprep.subr.bf16.mxu0 0
      %1021 = vmatpush2.bf16.xpose.msra.mxu0 0
      %1022 = vmatprep.subr.bf16.mxu0 0
      %1023 = vmatpush2.bf16.xpose.msra.mxu0 0
      %1024 = vmatprep.subr.bf16.mxu0 0
      %1025 = vmatpush2.bf16.xpose.msra.mxu0 0
      %1026 = vmatprep.subr.bf16.mxu0 0
      %1027 = vmatpush2.bf16.xpose.msra.mxu0 0
      %1028 = vmatprep.subr.bf16.mxu0 0
      %1029 = vmatpush2.bf16.xpose.msra.mxu0 0
      %1030 = vmatprep.subr.bf16.mxu0 0
      %1031 = vmatpush2.bf16.xpose.msra.mxu0 0
      %1032 = vmatprep.subr.bf16.mxu0 0
      %1033 = vmatpush2.bf16.xpose.msra.mxu0 0
      %1034 = vmatprep.subr.bf16.mxu0 0
      %1035 = vmatpush2.bf16.xpose.msra.mxu0 0
      %1036 = vmatprep.mubr.bf16.mxu0 0
      %1037 = vmatmul.mubr.bf16.gmra.mxu0 %v1002
      %v1038 = vpop.f32.mrf.mxu0
      %v1039 = vadd.f32 0.0, %v1038
      %v1040 = vpop.f32.mrf.mxu0
      %v1041 = vpop.f32.mrf.mxu0
      %v1042 = vpop.f32.mrf.mxu0
      %1043 = vdwg.mxu0
      %v1044 = vpack.i.b16 %v721, %v721
      %v1045 = vlaneseq
      %v1046 = vshrl.u32 %v1045, 7
      %v1047 = vsub.s32 0, %v1046
      %v1048 = vrot.slane %v1044, %v1047
      %1050 = vmatprep.subr.bf16.mxu0 0
      %1051 = vmatpush1.bf16.xpose.msra.mxu0 0
      %1052 = vmatprep.subr.bf16.mxu0 0
      %1053 = vmatpush1.bf16.xpose.msra.mxu0 0
      %1054 = vmatprep.subr.bf16.mxu0 0
      %1055 = vmatpush1.bf16.xpose.msra.mxu0 0
      %1056 = vmatprep.subr.bf16.mxu0 0
      %1057 = vmatpush1.bf16.xpose.msra.mxu0 0
      %1058 = vmatprep.subr.bf16.mxu0 0
      %1059 = vmatpush1.bf16.xpose.msra.mxu0 0
      %1060 = vmatprep.subr.bf16.mxu0 0
      %1061 = vmatpush1.bf16.xpose.msra.mxu0 0
      %1062 = vmatprep.subr.bf16.mxu0 0
      %1063 = vmatpush1.bf16.xpose.msra.mxu0 0
      %1064 = vmatprep.subr.bf16.mxu0 0
      %1065 = vmatpush1.bf16.xpose.msra.mxu0 %v149
      %1066 = vmatprep.subr.bf16.mxu0 0
      %1067 = vmatpush2.bf16.xpose.msra.mxu0 0
      %1068 = vmatprep.subr.bf16.mxu0 0
      %1069 = vmatpush2.bf16.xpose.msra.mxu0 0
      %1070 = vmatprep.subr.bf16.mxu0 0
      %1071 = vmatpush2.bf16.xpose.msra.mxu0 0
      %1072 = vmatprep.subr.bf16.mxu0 0
      %1073 = vmatpush2.bf16.xpose.msra.mxu0 0
      %1074 = vmatprep.subr.bf16.mxu0 0
      %1075 = vmatpush2.bf16.xpose.msra.mxu0 0
      %1076 = vmatprep.subr.bf16.mxu0 0
      %1077 = vmatpush2.bf16.xpose.msra.mxu0 0
      %1078 = vmatprep.subr.bf16.mxu0 0
      %1079 = vmatpush2.bf16.xpose.msra.mxu0 0
      %1080 = vmatprep.subr.bf16.mxu0 0
      %1081 = vmatpush2.bf16.xpose.msra.mxu0 0
      %1082 = vmatprep.mubr.bf16.mxu0 0
      %1083 = vmatmul.mubr.bf16.gmra.mxu0 %v1048
      %v1084 = vpop.f32.mrf.mxu0
      %v1085 = vadd.f32 0.0, %v1084
      %v1086 = vpop.f32.mrf.mxu0
      %v1087 = vpop.f32.mrf.mxu0
      %v1088 = vpop.f32.mrf.mxu0
      %1089 = vdwg.mxu0
      %vm1090 = vcmask 57344
      %v1091 = vsel %vm1090, %v763, -inf
      %1092 = vmax.xlane.f32.xlu0 %v1091
      %v1093 = vpop.xlane.xlu0 %1092
      %v1094 = vsel %vm1090, %v809, -inf
      %1095 = vmax.xlane.f32.xlu0 %v1094
      %v1096 = vpop.xlane.xlu0 %1095
      %v1097 = vsel %vm1090, %v855, -inf
      %1098 = vmax.xlane.f32.xlu0 %v1097
      %v1099 = vpop.xlane.xlu0 %1098
      %v1100 = vsel %vm1090, %v901, -inf
      %1101 = vmax.xlane.f32.xlu0 %v1100
      %v1102 = vpop.xlane.xlu0 %1101
      %v1103 = vsel %vm1090, %v947, -inf
      %1104 = vmax.xlane.f32.xlu0 %v1103
      %v1105 = vpop.xlane.xlu0 %1104
      %v1106 = vsel %vm1090, %v993, -inf
      %1107 = vmax.xlane.f32.xlu0 %v1106
      %v1108 = vpop.xlane.xlu0 %1107
      %v1109 = vsel %vm1090, %v1039, -inf
      %1110 = vmax.xlane.f32.xlu0 %v1109
      %v1111 = vpop.xlane.xlu0 %1110
      %v1112 = vsel %vm1090, %v1085, -inf
      %1113 = vmax.xlane.f32.xlu0 %v1112
      %v1114 = vpop.xlane.xlu0 %1113
      %v1115 = vsub.f32 %v763, %v1093
      %v1116 = vsub.f32 %v809, %v1096
      %v1117 = vsub.f32 %v855, %v1099
      %v1118 = vsub.f32 %v901, %v1102
      %v1119 = vsub.f32 %v947, %v1105
      %v1120 = vsub.f32 %v993, %v1108
      %v1121 = vsub.f32 %v1039, %v1111
      %v1122 = vsub.f32 %v1085, %v1114
      %v1123 = vmul.f32 %v1115, 1.442695
      %v1124 = vpow.pop %v1123
      %v1125 = vmul.f32 %v1116, 1.442695
      %v1126 = vpow.pop %v1125
      %v1127 = vmul.f32 %v1117, 1.442695
      %v1128 = vpow.pop %v1127
      %v1129 = vmul.f32 %v1118, 1.442695
      %v1130 = vpow.pop %v1129
      %v1131 = vmul.f32 %v1119, 1.442695
      %v1132 = vpow.pop %v1131
      %v1133 = vmul.f32 %v1120, 1.442695
      %v1134 = vpow.pop %v1133
      %v1135 = vmul.f32 %v1121, 1.442695
      %v1136 = vpow.pop %v1135
      %v1137 = vmul.f32 %v1122, 1.442695
      %v1138 = vpow.pop %v1137
      %v1139 = vsel %vm1090, %v1124, 0.0
      %1140 = vadd.xlane.f32.xlu0 %v1139
      %v1141 = vpop.xlane.xlu0 %1140
      %v1142 = vsel %vm1090, %v1126, 0.0
      %1143 = vadd.xlane.f32.xlu0 %v1142
      %v1144 = vpop.xlane.xlu0 %1143
      %v1145 = vsel %vm1090, %v1128, 0.0
      %1146 = vadd.xlane.f32.xlu0 %v1145
      %v1147 = vpop.xlane.xlu0 %1146
      %v1148 = vsel %vm1090, %v1130, 0.0
      %1149 = vadd.xlane.f32.xlu0 %v1148
      %v1150 = vpop.xlane.xlu0 %1149
      %v1151 = vsel %vm1090, %v1132, 0.0
      %1152 = vadd.xlane.f32.xlu0 %v1151
      %v1153 = vpop.xlane.xlu0 %1152
      %v1154 = vsel %vm1090, %v1134, 0.0
      %1155 = vadd.xlane.f32.xlu0 %v1154
      %v1156 = vpop.xlane.xlu0 %1155
      %v1157 = vsel %vm1090, %v1136, 0.0
      %1158 = vadd.xlane.f32.xlu0 %v1157
      %v1159 = vpop.xlane.xlu0 %1158
      %v1160 = vsel %vm1090, %v1138, 0.0
      %1161 = vadd.xlane.f32.xlu0 %v1160
      %v1162 = vpop.xlane.xlu0 %1161
      %v1163 = vrcp.pop %v1141
      %v1164 = vrcp.pop %v1144
      %v1165 = vrcp.pop %v1147
      %v1166 = vrcp.pop %v1150
      %v1167 = vrcp.pop %v1153
      %v1168 = vrcp.pop %v1156
      %v1169 = vrcp.pop %v1159
      %v1170 = vrcp.pop %v1162
      %v1171 = vmul.f32 %v1124, %v1163
      %v1172 = vmul.f32 %v1126, %v1164
      %v1173 = vmul.f32 %v1128, %v1165
      %v1174 = vmul.f32 %v1130, %v1166
      %v1175 = vmul.f32 %v1132, %v1167
      %v1176 = vmul.f32 %v1134, %v1168
      %v1177 = vmul.f32 %v1136, %v1169
      %v1178 = vmul.f32 %v1138, %v1170
      %v1179 = vpack.c.bf16 %v1171, %v1171
      %v1180 = vpack.c.bf16 %v1172, %v1172
      %v1181 = vpack.c.bf16 %v1173, %v1173
      %v1182 = vpack.c.bf16 %v1174, %v1174
      %v1183 = vpack.c.bf16 %v1175, %v1175
      %v1184 = vpack.c.bf16 %v1176, %v1176
      %v1185 = vpack.c.bf16 %v1177, %v1177
      %v1186 = vpack.c.bf16 %v1178, %v1178
      %vm1187 = vcmask 64512
      %v1189 = vsel %vm1187, %v1179, 0
      %vm1191 = vcmask 1043456
      %v1193 = vsel %vm1191, %v142, 0
      %1195 = vmatprep.subr.bf16.mxu0 0
      %1196 = vmatpush1.bf16.msra.mxu0 0
      %1197 = vmatprep.subr.bf16.mxu0 0
      %1198 = vmatpush1.bf16.msra.mxu0 0
      %1199 = vmatprep.subr.bf16.mxu0 0
      %1200 = vmatpush1.bf16.msra.mxu0 0
      %1201 = vmatprep.subr.bf16.mxu0 0
      %1202 = vmatpush1.bf16.msra.mxu0 0
      %1203 = vmatprep.subr.bf16.mxu0 0
      %1204 = vmatpush1.bf16.msra.mxu0 0
      %1205 = vmatprep.subr.bf16.mxu0 0
      %1206 = vmatpush1.bf16.msra.mxu0 0
      %1207 = vmatprep.subr.bf16.mxu0 0
      %1208 = vmatpush1.bf16.msra.mxu0 0
      %1209 = vmatprep.subr.bf16.mxu0 0
      %1210 = vmatpush1.bf16.msra.mxu0 %v1193
      %1211 = vmatprep.subr.bf16.mxu0 0
      %1212 = vmatpush2.bf16.msra.mxu0 0
      %1213 = vmatprep.subr.bf16.mxu0 0
      %1214 = vmatpush2.bf16.msra.mxu0 0
      %1215 = vmatprep.subr.bf16.mxu0 0
      %1216 = vmatpush2.bf16.msra.mxu0 0
      %1217 = vmatprep.subr.bf16.mxu0 0
      %1218 = vmatpush2.bf16.msra.mxu0 0
      %1219 = vmatprep.subr.bf16.mxu0 0
      %1220 = vmatpush2.bf16.msra.mxu0 0
      %1221 = vmatprep.subr.bf16.mxu0 0
      %1222 = vmatpush2.bf16.msra.mxu0 0
      %1223 = vmatprep.subr.bf16.mxu0 0
      %1224 = vmatpush2.bf16.msra.mxu0 0
      %1225 = vmatprep.subr.bf16.mxu0 0
      %1226 = vmatpush2.bf16.msra.mxu0 0
      %1227 = vmatprep.mubr.bf16.mxu0 0
      %1228 = vmatmul.mubr.bf16.gmra.mxu0 %v1189
      %v1229 = vpop.f32.mrf.mxu0
      %v1230 = vadd.f32 0.0, %v1229
      %v1231 = vpop.f32.mrf.mxu0
      %v1232 = vpop.f32.mrf.mxu0
      %v1233 = vpop.f32.mrf.mxu0
      %1234 = vdwg.mxu0
      %v1236 = vsel %vm1187, %v1180, 0
      %v1239 = vsel %vm1191, %v143, 0
      %1241 = vmatprep.subr.bf16.mxu0 0
      %1242 = vmatpush1.bf16.msra.mxu0 0
      %1243 = vmatprep.subr.bf16.mxu0 0
      %1244 = vmatpush1.bf16.msra.mxu0 0
      %1245 = vmatprep.subr.bf16.mxu0 0
      %1246 = vmatpush1.bf16.msra.mxu0 0
      %1247 = vmatprep.subr.bf16.mxu0 0
      %1248 = vmatpush1.bf16.msra.mxu0 0
      %1249 = vmatprep.subr.bf16.mxu0 0
      %1250 = vmatpush1.bf16.msra.mxu0 0
      %1251 = vmatprep.subr.bf16.mxu0 0
      %1252 = vmatpush1.bf16.msra.mxu0 0
      %1253 = vmatprep.subr.bf16.mxu0 0
      %1254 = vmatpush1.bf16.msra.mxu0 0
      %1255 = vmatprep.subr.bf16.mxu0 0
      %1256 = vmatpush1.bf16.msra.mxu0 %v1239
      %1257 = vmatprep.subr.bf16.mxu0 0
      %1258 = vmatpush2.bf16.msra.mxu0 0
      %1259 = vmatprep.subr.bf16.mxu0 0
      %1260 = vmatpush2.bf16.msra.mxu0 0
      %1261 = vmatprep.subr.bf16.mxu0 0
      %1262 = vmatpush2.bf16.msra.mxu0 0
      %1263 = vmatprep.subr.bf16.mxu0 0
      %1264 = vmatpush2.bf16.msra.mxu0 0
      %1265 = vmatprep.subr.bf16.mxu0 0
      %1266 = vmatpush2.bf16.msra.mxu0 0
      %1267 = vmatprep.subr.bf16.mxu0 0
      %1268 = vmatpush2.bf16.msra.mxu0 0
      %1269 = vmatprep.subr.bf16.mxu0 0
      %1270 = vmatpush2.bf16.msra.mxu0 0
      %1271 = vmatprep.subr.bf16.mxu0 0
      %1272 = vmatpush2.bf16.msra.mxu0 0
      %1273 = vmatprep.mubr.bf16.mxu0 0
      %1274 = vmatmul.mubr.bf16.gmra.mxu0 %v1236
      %v1275 = vpop.f32.mrf.mxu0
      %v1276 = vadd.f32 0.0, %v1275
      %v1277 = vpop.f32.mrf.mxu0
      %v1278 = vpop.f32.mrf.mxu0
      %v1279 = vpop.f32.mrf.mxu0
      %1280 = vdwg.mxu0
      %v1282 = vsel %vm1187, %v1181, 0
      %v1285 = vsel %vm1191, %v144, 0
      %1287 = vmatprep.subr.bf16.mxu0 0
      %1288 = vmatpush1.bf16.msra.mxu0 0
      %1289 = vmatprep.subr.bf16.mxu0 0
      %1290 = vmatpush1.bf16.msra.mxu0 0
      %1291 = vmatprep.subr.bf16.mxu0 0
      %1292 = vmatpush1.bf16.msra.mxu0 0
      %1293 = vmatprep.subr.bf16.mxu0 0
      %1294 = vmatpush1.bf16.msra.mxu0 0
      %1295 = vmatprep.subr.bf16.mxu0 0
      %1296 = vmatpush1.bf16.msra.mxu0 0
      %1297 = vmatprep.subr.bf16.mxu0 0
      %1298 = vmatpush1.bf16.msra.mxu0 0
      %1299 = vmatprep.subr.bf16.mxu0 0
      %1300 = vmatpush1.bf16.msra.mxu0 0
      %1301 = vmatprep.subr.bf16.mxu0 0
      %1302 = vmatpush1.bf16.msra.mxu0 %v1285
      %1303 = vmatprep.subr.bf16.mxu0 0
      %1304 = vmatpush2.bf16.msra.mxu0 0
      %1305 = vmatprep.subr.bf16.mxu0 0
      %1306 = vmatpush2.bf16.msra.mxu0 0
      %1307 = vmatprep.subr.bf16.mxu0 0
      %1308 = vmatpush2.bf16.msra.mxu0 0
      %1309 = vmatprep.subr.bf16.mxu0 0
      %1310 = vmatpush2.bf16.msra.mxu0 0
      %1311 = vmatprep.subr.bf16.mxu0 0
      %1312 = vmatpush2.bf16.msra.mxu0 0
      %1313 = vmatprep.subr.bf16.mxu0 0
      %1314 = vmatpush2.bf16.msra.mxu0 0
      %1315 = vmatprep.subr.bf16.mxu0 0
      %1316 = vmatpush2.bf16.msra.mxu0 0
      %1317 = vmatprep.subr.bf16.mxu0 0
      %1318 = vmatpush2.bf16.msra.mxu0 0
      %1319 = vmatprep.mubr.bf16.mxu0 0
      %1320 = vmatmul.mubr.bf16.gmra.mxu0 %v1282
      %v1321 = vpop.f32.mrf.mxu0
      %v1322 = vadd.f32 0.0, %v1321
      %v1323 = vpop.f32.mrf.mxu0
      %v1324 = vpop.f32.mrf.mxu0
      %v1325 = vpop.f32.mrf.mxu0
      %1326 = vdwg.mxu0
      %v1328 = vsel %vm1187, %v1182, 0
      %v1331 = vsel %vm1191, %v145, 0
      %1333 = vmatprep.subr.bf16.mxu0 0
      %1334 = vmatpush1.bf16.msra.mxu0 0
      %1335 = vmatprep.subr.bf16.mxu0 0
      %1336 = vmatpush1.bf16.msra.mxu0 0
      %1337 = vmatprep.subr.bf16.mxu0 0
      %1338 = vmatpush1.bf16.msra.mxu0 0
      %1339 = vmatprep.subr.bf16.mxu0 0
      %1340 = vmatpush1.bf16.msra.mxu0 0
      %1341 = vmatprep.subr.bf16.mxu0 0
      %1342 = vmatpush1.bf16.msra.mxu0 0
      %1343 = vmatprep.subr.bf16.mxu0 0
      %1344 = vmatpush1.bf16.msra.mxu0 0
      %1345 = vmatprep.subr.bf16.mxu0 0
      %1346 = vmatpush1.bf16.msra.mxu0 0
      %1347 = vmatprep.subr.bf16.mxu0 0
      %1348 = vmatpush1.bf16.msra.mxu0 %v1331
      %1349 = vmatprep.subr.bf16.mxu0 0
      %1350 = vmatpush2.bf16.msra.mxu0 0
      %1351 = vmatprep.subr.bf16.mxu0 0
      %1352 = vmatpush2.bf16.msra.mxu0 0
      %1353 = vmatprep.subr.bf16.mxu0 0
      %1354 = vmatpush2.bf16.msra.mxu0 0
      %1355 = vmatprep.subr.bf16.mxu0 0
      %1356 = vmatpush2.bf16.msra.mxu0 0
      %1357 = vmatprep.subr.bf16.mxu0 0
      %1358 = vmatpush2.bf16.msra.mxu0 0
      %1359 = vmatprep.subr.bf16.mxu0 0
      %1360 = vmatpush2.bf16.msra.mxu0 0
      %1361 = vmatprep.subr.bf16.mxu0 0
      %1362 = vmatpush2.bf16.msra.mxu0 0
      %1363 = vmatprep.subr.bf16.mxu0 0
      %1364 = vmatpush2.bf16.msra.mxu0 0
      %1365 = vmatprep.mubr.bf16.mxu0 0
      %1366 = vmatmul.mubr.bf16.gmra.mxu0 %v1328
      %v1367 = vpop.f32.mrf.mxu0
      %v1368 = vadd.f32 0.0, %v1367
      %v1369 = vpop.f32.mrf.mxu0
      %v1370 = vpop.f32.mrf.mxu0
      %v1371 = vpop.f32.mrf.mxu0
      %1372 = vdwg.mxu0
      %v1374 = vsel %vm1187, %v1183, 0
      %v1377 = vsel %vm1191, %v146, 0
      %1379 = vmatprep.subr.bf16.mxu0 0
      %1380 = vmatpush1.bf16.msra.mxu0 0
      %1381 = vmatprep.subr.bf16.mxu0 0
      %1382 = vmatpush1.bf16.msra.mxu0 0
      %1383 = vmatprep.subr.bf16.mxu0 0
      %1384 = vmatpush1.bf16.msra.mxu0 0
      %1385 = vmatprep.subr.bf16.mxu0 0
      %1386 = vmatpush1.bf16.msra.mxu0 0
      %1387 = vmatprep.subr.bf16.mxu0 0
      %1388 = vmatpush1.bf16.msra.mxu0 0
      %1389 = vmatprep.subr.bf16.mxu0 0
      %1390 = vmatpush1.bf16.msra.mxu0 0
      %1391 = vmatprep.subr.bf16.mxu0 0
      %1392 = vmatpush1.bf16.msra.mxu0 0
      %1393 = vmatprep.subr.bf16.mxu0 0
      %1394 = vmatpush1.bf16.msra.mxu0 %v1377
      %1395 = vmatprep.subr.bf16.mxu0 0
      %1396 = vmatpush2.bf16.msra.mxu0 0
      %1397 = vmatprep.subr.bf16.mxu0 0
      %1398 = vmatpush2.bf16.msra.mxu0 0
      %1399 = vmatprep.subr.bf16.mxu0 0
      %1400 = vmatpush2.bf16.msra.mxu0 0
      %1401 = vmatprep.subr.bf16.mxu0 0
      %1402 = vmatpush2.bf16.msra.mxu0 0
      %1403 = vmatprep.subr.bf16.mxu0 0
      %1404 = vmatpush2.bf16.msra.mxu0 0
      %1405 = vmatprep.subr.bf16.mxu0 0
      %1406 = vmatpush2.bf16.msra.mxu0 0
      %1407 = vmatprep.subr.bf16.mxu0 0
      %1408 = vmatpush2.bf16.msra.mxu0 0
      %1409 = vmatprep.subr.bf16.mxu0 0
      %1410 = vmatpush2.bf16.msra.mxu0 0
      %1411 = vmatprep.mubr.bf16.mxu0 0
      %1412 = vmatmul.mubr.bf16.gmra.mxu0 %v1374
      %v1413 = vpop.f32.mrf.mxu0
      %v1414 = vadd.f32 0.0, %v1413
      %v1415 = vpop.f32.mrf.mxu0
      %v1416 = vpop.f32.mrf.mxu0
      %v1417 = vpop.f32.mrf.mxu0
      %1418 = vdwg.mxu0
      %v1420 = vsel %vm1187, %v1184, 0
      %v1423 = vsel %vm1191, %v147, 0
      %1425 = vmatprep.subr.bf16.mxu0 0
      %1426 = vmatpush1.bf16.msra.mxu0 0
      %1427 = vmatprep.subr.bf16.mxu0 0
      %1428 = vmatpush1.bf16.msra.mxu0 0
      %1429 = vmatprep.subr.bf16.mxu0 0
      %1430 = vmatpush1.bf16.msra.mxu0 0
      %1431 = vmatprep.subr.bf16.mxu0 0
      %1432 = vmatpush1.bf16.msra.mxu0 0
      %1433 = vmatprep.subr.bf16.mxu0 0
      %1434 = vmatpush1.bf16.msra.mxu0 0
      %1435 = vmatprep.subr.bf16.mxu0 0
      %1436 = vmatpush1.bf16.msra.mxu0 0
      %1437 = vmatprep.subr.bf16.mxu0 0
      %1438 = vmatpush1.bf16.msra.mxu0 0
      %1439 = vmatprep.subr.bf16.mxu0 0
      %1440 = vmatpush1.bf16.msra.mxu0 %v1423
      %1441 = vmatprep.subr.bf16.mxu0 0
      %1442 = vmatpush2.bf16.msra.mxu0 0
      %1443 = vmatprep.subr.bf16.mxu0 0
      %1444 = vmatpush2.bf16.msra.mxu0 0
      %1445 = vmatprep.subr.bf16.mxu0 0
      %1446 = vmatpush2.bf16.msra.mxu0 0
      %1447 = vmatprep.subr.bf16.mxu0 0
      %1448 = vmatpush2.bf16.msra.mxu0 0
      %1449 = vmatprep.subr.bf16.mxu0 0
      %1450 = vmatpush2.bf16.msra.mxu0 0
      %1451 = vmatprep.subr.bf16.mxu0 0
      %1452 = vmatpush2.bf16.msra.mxu0 0
      %1453 = vmatprep.subr.bf16.mxu0 0
      %1454 = vmatpush2.bf16.msra.mxu0 0
      %1455 = vmatprep.subr.bf16.mxu0 0
      %1456 = vmatpush2.bf16.msra.mxu0 0
      %1457 = vmatprep.mubr.bf16.mxu0 0
      %1458 = vmatmul.mubr.bf16.gmra.mxu0 %v1420
      %v1459 = vpop.f32.mrf.mxu0
      %v1460 = vadd.f32 0.0, %v1459
      %v1461 = vpop.f32.mrf.mxu0
      %v1462 = vpop.f32.mrf.mxu0
      %v1463 = vpop.f32.mrf.mxu0
      %1464 = vdwg.mxu0
      %v1466 = vsel %vm1187, %v1185, 0
      %v1469 = vsel %vm1191, %v148, 0
      %1471 = vmatprep.subr.bf16.mxu0 0
      %1472 = vmatpush1.bf16.msra.mxu0 0
      %1473 = vmatprep.subr.bf16.mxu0 0
      %1474 = vmatpush1.bf16.msra.mxu0 0
      %1475 = vmatprep.subr.bf16.mxu0 0
      %1476 = vmatpush1.bf16.msra.mxu0 0
      %1477 = vmatprep.subr.bf16.mxu0 0
      %1478 = vmatpush1.bf16.msra.mxu0 0
      %1479 = vmatprep.subr.bf16.mxu0 0
      %1480 = vmatpush1.bf16.msra.mxu0 0
      %1481 = vmatprep.subr.bf16.mxu0 0
      %1482 = vmatpush1.bf16.msra.mxu0 0
      %1483 = vmatprep.subr.bf16.mxu0 0
      %1484 = vmatpush1.bf16.msra.mxu0 0
      %1485 = vmatprep.subr.bf16.mxu0 0
      %1486 = vmatpush1.bf16.msra.mxu0 %v1469
      %1487 = vmatprep.subr.bf16.mxu0 0
      %1488 = vmatpush2.bf16.msra.mxu0 0
      %1489 = vmatprep.subr.bf16.mxu0 0
      %1490 = vmatpush2.bf16.msra.mxu0 0
      %1491 = vmatprep.subr.bf16.mxu0 0
      %1492 = vmatpush2.bf16.msra.mxu0 0
      %1493 = vmatprep.subr.bf16.mxu0 0
      %1494 = vmatpush2.bf16.msra.mxu0 0
      %1495 = vmatprep.subr.bf16.mxu0 0
      %1496 = vmatpush2.bf16.msra.mxu0 0
      %1497 = vmatprep.subr.bf16.mxu0 0
      %1498 = vmatpush2.bf16.msra.mxu0 0
      %1499 = vmatprep.subr.bf16.mxu0 0
      %1500 = vmatpush2.bf16.msra.mxu0 0
      %1501 = vmatprep.subr.bf16.mxu0 0
      %1502 = vmatpush2.bf16.msra.mxu0 0
      %1503 = vmatprep.mubr.bf16.mxu0 0
      %1504 = vmatmul.mubr.bf16.gmra.mxu0 %v1466
      %v1505 = vpop.f32.mrf.mxu0
      %v1506 = vadd.f32 0.0, %v1505
      %v1507 = vpop.f32.mrf.mxu0
      %v1508 = vpop.f32.mrf.mxu0
      %v1509 = vpop.f32.mrf.mxu0
      %1510 = vdwg.mxu0
      %v1512 = vsel %vm1187, %v1186, 0
      %v1515 = vsel %vm1191, %v149, 0
      %1517 = vmatprep.subr.bf16.mxu0 0
      %1518 = vmatpush1.bf16.msra.mxu0 0
      %1519 = vmatprep.subr.bf16.mxu0 0
      %1520 = vmatpush1.bf16.msra.mxu0 0
      %1521 = vmatprep.subr.bf16.mxu0 0
      %1522 = vmatpush1.bf16.msra.mxu0 0
      %1523 = vmatprep.subr.bf16.mxu0 0
      %1524 = vmatpush1.bf16.msra.mxu0 0
      %1525 = vmatprep.subr.bf16.mxu0 0
      %1526 = vmatpush1.bf16.msra.mxu0 0
      %1527 = vmatprep.subr.bf16.mxu0 0
      %1528 = vmatpush1.bf16.msra.mxu0 0
      %1529 = vmatprep.subr.bf16.mxu0 0
      %1530 = vmatpush1.bf16.msra.mxu0 0
      %1531 = vmatprep.subr.bf16.mxu0 0
      %1532 = vmatpush1.bf16.msra.mxu0 %v1515
      %1533 = vmatprep.subr.bf16.mxu0 0
      %1534 = vmatpush2.bf16.msra.mxu0 0
      %1535 = vmatprep.subr.bf16.mxu0 0
      %1536 = vmatpush2.bf16.msra.mxu0 0
      %1537 = vmatprep.subr.bf16.mxu0 0
      %1538 = vmatpush2.bf16.msra.mxu0 0
      %1539 = vmatprep.subr.bf16.mxu0 0
      %1540 = vmatpush2.bf16.msra.mxu0 0
      %1541 = vmatprep.subr.bf16.mxu0 0
      %1542 = vmatpush2.bf16.msra.mxu0 0
      %1543 = vmatprep.subr.bf16.mxu0 0
      %1544 = vmatpush2.bf16.msra.mxu0 0
      %1545 = vmatprep.subr.bf16.mxu0 0
      %1546 = vmatpush2.bf16.msra.mxu0 0
      %1547 = vmatprep.subr.bf16.mxu0 0
      %1548 = vmatpush2.bf16.msra.mxu0 0
      %1549 = vmatprep.mubr.bf16.mxu0 0
      %1550 = vmatmul.mubr.bf16.gmra.mxu0 %v1512
      %v1551 = vpop.f32.mrf.mxu0
      %v1552 = vadd.f32 0.0, %v1551
      %v1553 = vpop.f32.mrf.mxu0
      %v1554 = vpop.f32.mrf.mxu0
      %v1555 = vpop.f32.mrf.mxu0
      %1556 = vdwg.mxu0
      %v1565 = vrot.slane %v1276, 7
      %vm1566 = vcmask 1041409
      %v1567 = vsel %vm1566, %v1565, %v1230
      %v1568 = vrot.slane %v1322, 6
      %vm1569 = vcmask 1042434
      %v1570 = vsel %vm1569, %v1568, %v1567
      %v1571 = vrot.slane %v1368, 5
      %vm1572 = vcmask 1043459
      %v1573 = vsel %vm1572, %v1571, %v1570
      %v1574 = vrot.slane %v1414, 4
      %vm1575 = vcmask 1044484
      %v1576 = vsel %vm1575, %v1574, %v1573
      %v1577 = vrot.slane %v1460, 3
      %vm1578 = vcmask 1045509
      %v1579 = vsel %vm1578, %v1577, %v1576
      %v1580 = vrot.slane %v1506, 2
      %vm1581 = vcmask 1046534
      %v1582 = vsel %vm1581, %v1580, %v1579
      %v1583 = vrot.slane %v1552, 1
      %vm1584 = vcmask 1047559
      %v1585 = vsel %vm1584, %v1583, %v1582
      %v1587 = vpack.c.bf16 %v1585, %v1585
      %v1588 = vld [vmem:[#allocation12] sm:$0xf]
      %v1589 = vld [vmem:[#allocation12 + $0x4] sm:$0xf]
      %v1590 = vld [vmem:[#allocation12 + $0x8] sm:$0xf]
      %v1591 = vld [vmem:[#allocation12 + $0xc] sm:$0xf]
      %v1592 = vld [vmem:[#allocation12 + $0x10] sm:$0xf]
      %v1593 = vld [vmem:[#allocation12 + $0x14] sm:$0xf]
      %v1594 = vld [vmem:[#allocation12 + $0x18] sm:$0xf]
      %v1595 = vld [vmem:[#allocation12 + $0x1c] sm:$0xf]
      %v1596 = vld [vmem:[#allocation12 + $0x20] sm:$0xf]
      %v1597 = vld [vmem:[#allocation12 + $0x24] sm:$0xf]
      %v1598 = vld [vmem:[#allocation12 + $0x28] sm:$0xf]
      %v1599 = vld [vmem:[#allocation12 + $0x2c] sm:$0xf]
      %v1600 = vld [vmem:[#allocation12 + $0x30] sm:$0xf]
      %v1601 = vld [vmem:[#allocation12 + $0x34] sm:$0xf]
      %v1602 = vld [vmem:[#allocation12 + $0x38] sm:$0xf]
      %v1603 = vld [vmem:[#allocation12 + $0x3c] sm:$0xf]
      %v1604 = vld [vmem:[#allocation12 + $0x40] sm:$0xf]
      %v1605 = vld [vmem:[#allocation12 + $0x44] sm:$0xf]
      %v1606 = vld [vmem:[#allocation12 + $0x48] sm:$0xf]
      %v1607 = vld [vmem:[#allocation12 + $0x4c] sm:$0xf]
      %v1608 = vld [vmem:[#allocation12 + $0x50] sm:$0xf]
      %v1609 = vld [vmem:[#allocation12 + $0x54] sm:$0xf]
      %v1610 = vld [vmem:[#allocation12 + $0x58] sm:$0xf]
      %v1611 = vld [vmem:[#allocation12 + $0x5c] sm:$0xf]
      %v1612 = vld [vmem:[#allocation12 + $0x60] sm:$0xf]
      %v1613 = vld [vmem:[#allocation12 + $0x64] sm:$0xf]
      %v1614 = vld [vmem:[#allocation12 + $0x68] sm:$0xf]
      %v1615 = vld [vmem:[#allocation12 + $0x6c] sm:$0xf]
      %v1616 = vld [vmem:[#allocation12 + $0x70] sm:$0xf]
      %v1617 = vld [vmem:[#allocation12 + $0x74] sm:$0xf]
      %v1618 = vld [vmem:[#allocation12 + $0x78] sm:$0xf]
      %v1619 = vld [vmem:[#allocation12 + $0x7c] sm:$0xf]
      %v1620 = vld [vmem:[%s8] sm:$0x1]
      %v1622 = vlaneseq
      %v1623 = vshrl.u32 %v1622, 7
      %v1624 = vsub.s32 0, %v1623
      %v1625 = vrot.slane %v1620, %v1624
      %v1659 = vunpack.c.l.b16 %v1588
      %v1660 = vunpack.c.l.b16 %v1589
      %v1661 = vunpack.c.l.b16 %v1590
      %v1662 = vunpack.c.l.b16 %v1591
      %v1663 = vunpack.c.l.b16 %v1592
      %v1664 = vunpack.c.l.b16 %v1593
      %v1665 = vunpack.c.l.b16 %v1594
      %v1666 = vunpack.c.l.b16 %v1595
      %v1667 = vunpack.c.l.b16 %v1596
      %v1668 = vunpack.c.l.b16 %v1597
      %v1669 = vunpack.c.l.b16 %v1598
      %v1670 = vunpack.c.l.b16 %v1599
      %v1671 = vunpack.c.l.b16 %v1600
      %v1672 = vunpack.c.l.b16 %v1601
      %v1673 = vunpack.c.l.b16 %v1602
      %v1674 = vunpack.c.l.b16 %v1603
      %v1675 = vunpack.c.l.b16 %v1604
      %v1676 = vunpack.c.l.b16 %v1605
      %v1677 = vunpack.c.l.b16 %v1606
      %v1678 = vunpack.c.l.b16 %v1607
      %v1679 = vunpack.c.l.b16 %v1608
      %v1680 = vunpack.c.l.b16 %v1609
      %v1681 = vunpack.c.l.b16 %v1610
      %v1682 = vunpack.c.l.b16 %v1611
      %v1683 = vunpack.c.l.b16 %v1612
      %v1684 = vunpack.c.l.b16 %v1613
      %v1685 = vunpack.c.l.b16 %v1614
      %v1686 = vunpack.c.l.b16 %v1615
      %v1687 = vunpack.c.l.b16 %v1616
      %v1688 = vunpack.c.l.b16 %v1617
      %v1689 = vunpack.c.l.b16 %v1618
      %v1690 = vunpack.c.l.b16 %v1619
      %v1691 = vpack.c.b16 %v1660, %v1659
      %v1692 = vpack.c.b16 %v1662, %v1661
      %v1693 = vpack.c.b16 %v1664, %v1663
      %v1694 = vpack.c.b16 %v1666, %v1665
      %v1695 = vpack.c.b16 %v1668, %v1667
      %v1696 = vpack.c.b16 %v1670, %v1669
      %v1697 = vpack.c.b16 %v1672, %v1671
      %v1698 = vpack.c.b16 %v1674, %v1673
      %v1699 = vpack.c.b16 %v1676, %v1675
      %v1700 = vpack.c.b16 %v1678, %v1677
      %v1701 = vpack.c.b16 %v1680, %v1679
      %v1702 = vpack.c.b16 %v1682, %v1681
      %v1703 = vpack.c.b16 %v1684, %v1683
      %v1704 = vpack.c.b16 %v1686, %v1685
      %v1705 = vpack.c.b16 %v1688, %v1687
      %v1706 = vpack.c.b16 %v1690, %v1689
      %1723 = vmatprep.subr.bf16.mxu0 0
      %1724 = vmatpush1.bf16.msra.mxu0 %v1698
      %1725 = vmatprep.subr.bf16.mxu0 0
      %1726 = vmatpush1.bf16.msra.mxu0 %v1697
      %1727 = vmatprep.subr.bf16.mxu0 0
      %1728 = vmatpush1.bf16.msra.mxu0 %v1696
      %1729 = vmatprep.subr.bf16.mxu0 0
      %1730 = vmatpush1.bf16.msra.mxu0 %v1695
      %1731 = vmatprep.subr.bf16.mxu0 0
      %1732 = vmatpush1.bf16.msra.mxu0 %v1694
      %1733 = vmatprep.subr.bf16.mxu0 0
      %1734 = vmatpush1.bf16.msra.mxu0 %v1693
      %1735 = vmatprep.subr.bf16.mxu0 0
      %1736 = vmatpush1.bf16.msra.mxu0 %v1692
      %1737 = vmatprep.subr.bf16.mxu0 0
      %1738 = vmatpush1.bf16.msra.mxu0 %v1691
      %1739 = vmatprep.subr.bf16.mxu0 0
      %1740 = vmatpush2.bf16.msra.mxu0 %v1706
      %1741 = vmatprep.subr.bf16.mxu0 0
      %1742 = vmatpush2.bf16.msra.mxu0 %v1705
      %1743 = vmatprep.subr.bf16.mxu0 0
      %1744 = vmatpush2.bf16.msra.mxu0 %v1704
      %1745 = vmatprep.subr.bf16.mxu0 0
      %1746 = vmatpush2.bf16.msra.mxu0 %v1703
      %1747 = vmatprep.subr.bf16.mxu0 0
      %1748 = vmatpush2.bf16.msra.mxu0 %v1702
      %1749 = vmatprep.subr.bf16.mxu0 0
      %1750 = vmatpush2.bf16.msra.mxu0 %v1701
      %1751 = vmatprep.subr.bf16.mxu0 0
      %1752 = vmatpush2.bf16.msra.mxu0 %v1700
      %1753 = vmatprep.subr.bf16.mxu0 0
      %1754 = vmatpush2.bf16.msra.mxu0 %v1699
      %1755 = vmatprep.mubr.bf16.mxu0 %v1587
      %1756 = vmatmul.mubr.bf16.gmra.mxu0 %v688
      %v1757 = vpop.f32.mrf.mxu0
      %v1758 = vadd.f32 %v1625, %v1757
      %v1759 = vpop.f32.mrf.mxu0
      %v1760 = vpop.f32.mrf.mxu0
      %v1761 = vpop.f32.mrf.mxu0
      %1762 = vdwg.mxu0
      %v1763 = vtanh.pop %v1758
      %1764 = vst [vmem:[#allocation16] sm:$0xff] %v687
      %v1765 = vpack.c.bf16 %v1763, %v1763
      %1766 = vst [vmem:[#allocation2] sm:$0xf] %v1765
      %vm1767 = vcmask 7168
      %1768 = vst.msk [vmem:[%s13] sm:$0xff] %vm1767, -1e+30
      %1769 = vst.msk [vmem:[%s14] sm:$0xff] %vm1767, 0.0
    $region77: #{tpu_custom_call.1} parent=1 // pred_fallthru
      _
    %v1770 = vld [vmem:[#allocation2] sm:$0xf]
    %v1771 = vld [vmem:[#allocation14] sm:$0xf]
    %v1772 = vld [vmem:[#allocation14 + $0x4] sm:$0xf]
    %v1773 = vld [vmem:[#allocation14 + $0x8] sm:$0xf]
    %v1774 = vld [vmem:[#allocation14 + $0xc] sm:$0xf]
    %v1775 = vld [vmem:[#allocation14 + $0x10] sm:$0xf]
    %v1776 = vld [vmem:[#allocation14 + $0x14] sm:$0xf]
    %v1777 = vld [vmem:[#allocation14 + $0x18] sm:$0xf]
    %v1778 = vld [vmem:[#allocation14 + $0x1c] sm:$0xf]
    %v1779 = vld [vmem:[#allocation14 + $0x20] sm:$0xf]
    %v1780 = vld [vmem:[#allocation14 + $0x24] sm:$0xf]
    %v1781 = vld [vmem:[#allocation14 + $0x28] sm:$0xf]
    %v1782 = vld [vmem:[#allocation14 + $0x2c] sm:$0xf]
    %v1783 = vld [vmem:[#allocation14 + $0x30] sm:$0xf]
    %v1784 = vld [vmem:[#allocation14 + $0x34] sm:$0xf]
    %v1785 = vld [vmem:[#allocation14 + $0x38] sm:$0xf]
    %v1786 = vld [vmem:[#allocation14 + $0x3c] sm:$0xf]
    %v1787 = vld [vmem:[%s10] sm:$0x1]
    %v1789 = vlaneseq
    %v1790 = vshrl.u32 %v1789, 7
    %v1791 = vsub.s32 0, %v1790
    %v1792 = vrot.slane %v1787, %v1791
    %v1810 = vunpack.c.l.b16 %v1771
    %v1811 = vunpack.c.l.b16 %v1772
    %v1812 = vunpack.c.l.b16 %v1773
    %v1813 = vunpack.c.l.b16 %v1774
    %v1814 = vunpack.c.l.b16 %v1775
    %v1815 = vunpack.c.l.b16 %v1776
    %v1816 = vunpack.c.l.b16 %v1777
    %v1817 = vunpack.c.l.b16 %v1778
    %v1818 = vunpack.c.l.b16 %v1779
    %v1819 = vunpack.c.l.b16 %v1780
    %v1820 = vunpack.c.l.b16 %v1781
    %v1821 = vunpack.c.l.b16 %v1782
    %v1822 = vunpack.c.l.b16 %v1783
    %v1823 = vunpack.c.l.b16 %v1784
    %v1824 = vunpack.c.l.b16 %v1785
    %v1825 = vunpack.c.l.b16 %v1786
    %v1826 = vpack.c.b16 %v1811, %v1810
    %v1827 = vpack.c.b16 %v1813, %v1812
    %v1828 = vpack.c.b16 %v1815, %v1814
    %v1829 = vpack.c.b16 %v1817, %v1816
    %v1830 = vpack.c.b16 %v1819, %v1818
    %v1831 = vpack.c.b16 %v1821, %v1820
    %v1832 = vpack.c.b16 %v1823, %v1822
    %v1833 = vpack.c.b16 %v1825, %v1824
    %1842 = vmatprep.subr.bf16.mxu0 0
    %1843 = vmatpush1.bf16.msra.mxu0 %v1833
    %1844 = vmatprep.subr.bf16.mxu0 0
    %1845 = vmatpush1.bf16.msra.mxu0 %v1832
    %1846 = vmatprep.subr.bf16.mxu0 0
    %1847 = vmatpush1.bf16.msra.mxu0 %v1831
    %1848 = vmatprep.subr.bf16.mxu0 0
    %1849 = vmatpush1.bf16.msra.mxu0 %v1830
    %1850 = vmatprep.subr.bf16.mxu0 0
    %1851 = vmatpush1.bf16.msra.mxu0 %v1829
    %1852 = vmatprep.subr.bf16.mxu0 0
    %1853 = vmatpush1.bf16.msra.mxu0 %v1828
    %1854 = vmatprep.subr.bf16.mxu0 0
    %1855 = vmatpush1.bf16.msra.mxu0 %v1827
    %1856 = vmatprep.subr.bf16.mxu0 0
    %1857 = vmatpush1.bf16.msra.mxu0 %v1826
    %1858 = vmatprep.subr.bf16.mxu0 0
    %1859 = vmatpush2.bf16.msra.mxu0 0
    %1860 = vmatprep.subr.bf16.mxu0 0
    %1861 = vmatpush2.bf16.msra.mxu0 0
    %1862 = vmatprep.subr.bf16.mxu0 0
    %1863 = vmatpush2.bf16.msra.mxu0 0
    %1864 = vmatprep.subr.bf16.mxu0 0
    %1865 = vmatpush2.bf16.msra.mxu0 0
    %1866 = vmatprep.subr.bf16.mxu0 0
    %1867 = vmatpush2.bf16.msra.mxu0 0
    %1868 = vmatprep.subr.bf16.mxu0 0
    %1869 = vmatpush2.bf16.msra.mxu0 0
    %1870 = vmatprep.subr.bf16.mxu0 0
    %1871 = vmatpush2.bf16.msra.mxu0 0
    %1872 = vmatprep.subr.bf16.mxu0 0
    %1873 = vmatpush2.bf16.msra.mxu0 0
    %1874 = vmatprep.mubr.bf16.mxu0 0
    %1875 = vmatmul.mubr.bf16.gmra.mxu0 %v1770
    %v1876 = vpop.f32.mrf.mxu0
    %v1877 = vadd.f32 %v1792, %v1876
    %v1878 = vpop.f32.mrf.mxu0
    %v1879 = vpop.f32.mrf.mxu0
    %v1880 = vpop.f32.mrf.mxu0
    %1881 = vdwg.mxu0
    %1882 = vst [vmem:[#allocation15] sm:$0xff] %v1877
    %v1883 = vld [vmem:[%s13] sm:$0xff]
    %1884 = vmax.xlane.f32.xlu0 %v1877
    %v1885 = vpop.xlane.xlu0 %1884
    %v1886 = vmax.f32 %v1883, %v1885
    %v1887 = vld [vmem:[%s14] sm:$0xff]
    %v1888 = vsub.f32 %v1883, %v1886
    %v1889 = vmul.f32 %v1888, 1.442695
    %v1890 = vpow.pop %v1889
    %v1891 = vmul.f32 %v1887, %v1890
    %1893 = vset.pattern.permute.xlu0 0
    %1894 = vperm.xlu0 %1893, %v1886
    %v1895 = vpop.permute.xlu0 %1894
    %v1897 = vsub.f32 %v1877, %v1895
    %v1898 = vmul.f32 %v1897, 1.442695
    %v1899 = vpow.pop %v1898
    %1900 = vadd.xlane.f32.xlu0 %v1899
    %v1901 = vpop.xlane.xlu0 %1900
    %v1902 = vadd.f32 %v1891, %v1901
    %vm1903 = vcmask 7168
    %1904 = vst.msk [vmem:[%s14] sm:$0xff] %vm1903, %v1902
    %1905 = vst.msk [vmem:[%s13] sm:$0xff] %vm1903, %v1886
    // Predicated region
    $region78: #{tpu_custom_call.1} parent=1 // pred_check
      _
    $region79: #{tpu_custom_call.1} parent=1 // pred_check_branch
      %1907 = sbr.rel (0) target = $region81
    $region80: #{tpu_custom_call.1} parent=1 // pred_region
      %s1909 = ssub.s32 128, 128
      %1910 = vsyncadd [#allocation5], %s1909
      %s1912 = sshll.u32 [#allocation15], 4
      %s1913 = int_to_ptr.vmem [resolvable:$true] %s1912
      %1915 = dma.vmem_to_hbm [thread:$0]  %s1913, 128, %s11, [#allocation5]
    $region81: #{tpu_custom_call.1} parent=1 // pred_fallthru
      _
    // Predicated region
    $region82: #{tpu_custom_call.1} parent=1 // pred_check
      _
    $region83: #{tpu_custom_call.1} parent=1 // pred_check_branch
      %1917 = sbr.rel (0) target = $region85
    $region84: #{tpu_custom_call.1} parent=1 // pred_region
      %s1919 = ssub.s32 128, 128
      %1920 = vsyncadd [#allocation17], %s1919
      %s1922 = sshll.u32 [#allocation16], 4
      %s1923 = int_to_ptr.vmem [resolvable:$true] %s1922
      %1925 = dma.vmem_to_hbm [thread:$0]  %s1923, 128, %s12, [#allocation17]
    $region85: #{tpu_custom_call.1} parent=1 // pred_fallthru
      _
    // Predicated region
    $region86: #{tpu_custom_call.1} parent=1 // pred_check
      _
    $region87: #{tpu_custom_call.1} parent=1 // pred_check_branch
      %1927 = sbr.rel (0) target = $region89
    $region88: #{tpu_custom_call.1} parent=1 // pred_region
      _
    $region89: #{tpu_custom_call.1} parent=1 // pred_fallthru
      _
    // Predicated region
    $region90: #{tpu_custom_call.1} parent=1 // pred_check
      _
    $region91: #{tpu_custom_call.1} parent=1 // pred_check_branch
      %1929 = sbr.rel (0) target = $region93
    $region92: #{tpu_custom_call.1} parent=1 // pred_region
      _
    $region93: #{tpu_custom_call.1} parent=1 // pred_fallthru
      _
    // Predicated region
    $region94: #{tpu_custom_call.1} parent=1 // pred_check
      _
    $region95: #{tpu_custom_call.1} parent=1 // pred_check_branch
      %1931 = sbr.rel (0) target = $region97
    $region96: #{tpu_custom_call.1} parent=1 // pred_region
      %1932 = dma.done [#allocation5], 128
    $region97: #{tpu_custom_call.1} parent=1 // pred_fallthru
      _
    // Predicated region
    $region98: #{tpu_custom_call.1} parent=1 // pred_check
      _
    $region99: #{tpu_custom_call.1} parent=1 // pred_check_branch
      %1934 = sbr.rel (0) target = $region101
    $region100: #{tpu_custom_call.1} parent=1 // pred_region
      %1935 = dma.done [#allocation17], 128
    $region101: #{tpu_custom_call.1} parent=1 // pred_fallthru
      _
    // Predicated region
    $region102: #{tpu_custom_call.1} parent=1 // pred_check
      _
    $region103: #{tpu_custom_call.1} parent=1 // pred_check_branch
      %1937 = sbr.rel (0) target = $region105
    $region104: #{tpu_custom_call.1} parent=1 // pred_region
      _
    $region105: #{tpu_custom_call.1} parent=1 // pred_fallthru
      _
    // Predicated region
    $region106: #{tpu_custom_call.1} parent=1 // pred_check
      _
    $region107: #{tpu_custom_call.1} parent=1 // pred_check_branch
      %1939 = sbr.rel (0) target = $region109
    $region108: #{tpu_custom_call.1} parent=1 // pred_region
      _
    $region109: #{tpu_custom_call.1} parent=1 // pred_fallthru
      _
    %1940 = vsyncpa [#allocation4], 1
    %1941 = vsyncpa [#allocation7], 1
    %1942 = vsyncpa [#allocation10], 1
    %1943 = vsyncpa [#allocation13], 1
    %1944 = vsyncpa [#allocation5], 1
    %1945 = vsyncpa [#allocation17], 1

</llo_original>
